<compile_context>
chip_gen: v7x
topology: tpu7x:2x2x1
jax: 0.10.0
libtpu: 0.0.40
codegen_flags: <defaults>
</compile_context>

<pallas_src>
import functools

import jax
import jax.numpy as jnp
import numpy as np
from jax.experimental import pallas as pl
from jax.experimental.pallas import tpu as pltpu

_TAPS = 9           # 3x3 kernel taps
_TAPS_PAD = 16      # per-slab tap axis, zero padded (MXU-friendly contraction)
_N_SLABS = 4        # 2x2 conv1-output parity slabs
_TAPS_TOTAL = _N_SLABS * _TAPS_PAD


def _round_up(x, m):
    return (x + m - 1) // m * m


def _default_conv1_on_mxu():
    """conv1 on the MXU for v6e/v7x/newer, on the VPU for v5e and older."""
    try:
        kind = jax.devices()[0].device_kind.lower()
    except Exception:
        return True
    return not any(tag in kind for tag in ("v2", "v3", "v4", "v5"))


# ----------------------------------------------------------------------------
# Fused kernel: conv1 + ReLU + conv2 + ReLU for one (batch, time-tile) step.
# ----------------------------------------------------------------------------
def _fused_kernel(p_ref, w1_ref, b1_ref, w2_ref, b2_ref, o_ref, *,
                  nt2, Fq, D_pad, conv1_on_mxu):
    # p_ref : (M_in, 64)        conv1 im2col patches for this tile; row a*Fq+b
    #                           <-> conv1 output (2*(a+off)+pt, 2*b+pf);
    #                           column pp*16 + (ki*3+kj), pp = pt*2+pf,
    #                           columns 9..15 of each slab are zero.
    # w1_ref: (16, D_pad)       conv1 weights, tap-major (rows 9..15 zero).
    # w2_ref: (9, D_pad, D_pad) conv2 weights [tap, c_in, c_out], bf16.
    # o_ref : (nt2*Fq, D_pad)   conv2 output rows ordered (t2_local, f);
    #                           f >= F2 columns / channels >= D are junk.
    M_in = p_ref.shape[0]
    n_out = nt2 * Fq

    p_all = p_ref[...]                           # (M_in, 64)
    w1v = w1_ref[...]                            # (16, D_pad)
    b1v = b1_ref[...].astype(jnp.float32)        # (1, D_pad)
    b2v = b2_ref[...].astype(jnp.float32)        # (1, D_pad)

    # conv2 bias folded into the accumulator init (saves a full-width add).
    acc2 = jnp.broadcast_to(b2v, (n_out, D_pad))

    # One parity slab at a time: conv1 for the slab, then immediately its
    # conv2 tap matmuls -> only one slab activation live; slab p+1's conv1
    # can overlap slab p's MXU work.
    for pp in range(_N_SLABS):
        pt, pf = pp // 2, pp % 2
        pslab = p_all[:, pp * _TAPS_PAD:(pp + 1) * _TAPS_PAD]    # (M_in, 16)

        if conv1_on_mxu:
            # bf16 MXU matmul over the zero-padded 16-tap contraction.
            h = jnp.dot(pslab, w1v, preferred_element_type=jnp.float32)
            h = jnp.maximum(h + b1v, 0.0)
        else:
            # f32 VPU path: 9 broadcasted FMAs, conv1 bias folded into init.
            acc = jnp.broadcast_to(b1v, (M_in, D_pad))
            for t in range(_TAPS):
                acc = acc + pslab[:, t:t + 1].astype(jnp.float32) * w1v[t:t + 1, :]
            h = jnp.maximum(acc, 0.0)

        h16 = h.astype(jnp.bfloat16)             # conv2 runs on the bf16 MXU.

        # conv2 taps (ki, kj) reading this slab: ki in {pt, pt+2}, kj in
        # {pf, pf+2} (clipped to < 3).  Each tap's LHS is a contiguous static
        # row window of the flattened slab (rows ordered (a, b), width Fq).
        for ki in (pt, pt + 2):
            if ki > 2:
                continue
            for kj in (pf, pf + 2):
                if kj > 2:
                    continue
                start = (ki // 2) * Fq + (kj // 2)
                lhs = h16[start:start + n_out, :]
                acc2 = acc2 + jnp.dot(lhs, w2_ref[ki * 3 + kj],
                                      preferred_element_type=jnp.float32)

    o_ref[...] = jnp.maximum(acc2, 0.0).astype(o_ref.dtype)


# ----------------------------------------------------------------------------
# Forward pass (matches the PyTorch module; x is the pre-unsqueeze (B, T, F)).
# ----------------------------------------------------------------------------
@functools.partial(jax.jit, static_argnames=("tile_t2", "conv1_on_mxu"))
def _forward(x, w1, b1, w2, b2, *, tile_t2, conv1_on_mxu):
    B, T, F = x.shape
    D = w1.shape[0]
    assert T >= 7 and F >= 7, "need at least one valid output position"

    T1, F1 = (T - 3) // 2 + 1, (F - 3) // 2 + 1
    T2, F2 = (T1 - 3) // 2 + 1, (F1 - 3) // 2 + 1
    D_pad = _round_up(D, 128)          # lane-dense channel axis (128-multiple)
    Fq = F2 + 1                        # parity-slab freq width (== ceil(F1/2))

    # ---- time tiling: nt2 conv2-output frames per grid step ----------------
    nt2 = max(1, min(int(tile_t2), T2))
    # keep the output block's second-to-last dim a multiple of 8 when tiling
    while nt2 < T2 and (nt2 * Fq) % 8 != 0:
        nt2 += 1
    if nt2 >= T2:
        nt2, n_tiles = T2, 1
    else:
        n_tiles = -(-T2 // nt2)
    T2_pad = n_tiles * nt2
    Tq_pad = T2_pad + 2                # 1 halo row + 1 pad row for tap windows
    M_in = (nt2 + 2) * Fq
    n_out_tile = nt2 * Fq

    p_dtype = jnp.bfloat16 if conv1_on_mxu else jnp.float32

    # ---- parameter packing (tiny, fused into the jit) -----------------------
    w1m = jnp.pad(w1.reshape(D, 9).T, ((0, _TAPS_PAD - 9), (0, D_pad - D)))
    w1m = w1m.astype(jnp.bfloat16 if conv1_on_mxu else jnp.float32)  # (16, Dp)
    b1p = jnp.pad(b1, (0, D_pad - D)).reshape(1, D_pad).astype(jnp.float32)
    w2m = jnp.pad(jnp.transpose(w2, (2, 3, 1, 0)).reshape(9, D, D),
                  ((0, 0), (0, D_pad - D), (0, D_pad - D))).astype(jnp.bfloat16)
    b2p = jnp.pad(b2, (0, D_pad - D)).reshape(1, D_pad).astype(jnp.float32)

    # ---- conv1 im2col: one lane-dense trailing axis of 4 slabs x 16 taps ----
    Tpad, Fpad = 4 * Tq_pad + 8, 4 * Fq + 8
    xp = jnp.pad(x, ((0, 0), (0, Tpad - T), (0, Fpad - F)))
    slabs = []
    for pt in range(2):
        for pf in range(2):
            taps = []
            for ki in range(3):
                for kj in range(3):
                    ot, of = 2 * pt + ki, 2 * pf + kj
                    taps.append(xp[:, ot:ot + 4 * Tq_pad:4, of:of + 4 * Fq:4])
            s = jnp.stack(taps, axis=-1)                       # (B, Tq_pad, Fq, 9)
            slabs.append(jnp.pad(s, ((0, 0),) * 3 + ((0, _TAPS_PAD - 9),)))
    P_full = jnp.concatenate(slabs, axis=-1).astype(p_dtype)   # (B, Tq_pad, Fq, 64)

    # window into time tiles (2 halo Tq-rows duplicated per tile -> no overlap
    # between grid blocks, plain Blocked indexing)
    P_tiled = jnp.stack(
        [P_full[:, i * nt2:i * nt2 + nt2 + 2] for i in range(n_tiles)], axis=1)
    P_tiled = P_tiled.reshape(B, n_tiles, M_in, _TAPS_TOTAL)

    kern = functools.partial(_fused_kernel, nt2=nt2, Fq=Fq, D_pad=D_pad,
                             conv1_on_mxu=conv1_on_mxu)

    p_itemsize = 2 if conv1_on_mxu else 4
    flops = 2 * B * n_tiles * (4 * M_in * 9 * D_pad
                               + 9 * n_out_tile * D_pad * D_pad)
    bytes_accessed = (B * n_tiles * M_in * _TAPS_TOTAL * p_itemsize
                      + _TAPS_PAD * D_pad * p_itemsize
                      + 9 * D_pad * D_pad * 2
                      + 2 * D_pad * 4
                      + B * n_tiles * n_out_tile * D_pad * 4)

    vmem_limit = 48 * 1024 * 1024
    try:
        vmem_limit = min(vmem_limit,
                         int(pltpu.get_tpu_info().vmem_capacity_bytes) * 3 // 4)
    except Exception:
        pass

    out = pl.pallas_call(
        kern,
        out_shape=jax.ShapeDtypeStruct((B, n_tiles * n_out_tile, D_pad),
                                       jnp.float32),
        grid=(B, n_tiles),
        in_specs=[
            pl.BlockSpec((None, None, M_in, _TAPS_TOTAL),
                         lambda b, i: (b, i, 0, 0)),                  # patches
            pl.BlockSpec((_TAPS_PAD, D_pad), lambda b, i: (0, 0)),    # w1 (resident)
            pl.BlockSpec((1, D_pad), lambda b, i: (0, 0)),            # b1
            pl.BlockSpec((9, D_pad, D_pad), lambda b, i: (0, 0, 0)),  # w2 (resident)
            pl.BlockSpec((1, D_pad), lambda b, i: (0, 0)),            # b2
        ],
        out_specs=pl.BlockSpec((None, n_out_tile, D_pad),
                               lambda b, i: (b, i, 0)),
        compiler_params=pltpu.CompilerParams(
            dimension_semantics=("parallel", "parallel"),
            vmem_limit_bytes=vmem_limit),
        cost_estimate=pl.CostEstimate(flops=flops, transcendentals=0,
                                      bytes_accessed=bytes_accessed),
    )(P_tiled, w1m, b1p, w2m, b2p)

    # drop padded frames / junk freq column / channel padding, then
    # 'b d t f -> b t (d f)' on the small final output.
    out = out.reshape(B, T2_pad, Fq, D_pad)[:, :T2, :F2, :D]
    return jnp.transpose(out, (0, 1, 3, 2)).reshape(B, T2, D * F2)


def conv2d_subsampling(x, w1, b1, w2, b2, *, tile_t2=64, conv1_on_mxu=None):
    """Conv2dSubsampling forward.  x: (B, T, F); params in PyTorch OIHW layout."""
    if conv1_on_mxu is None:
        conv1_on_mxu = _default_conv1_on_mxu()
    return _forward(x, w1, b1, w2, b2, tile_t2=int(tile_t2),
                    conv1_on_mxu=bool(conv1_on_mxu))


# ----------------------------------------------------------------------------
# Pure-JAX reference (f32 lax.conv) for the correctness check
# ----------------------------------------------------------------------------
def _ref_forward(x, w1, b1, w2, b2):
    dn = ("NCHW", "OIHW", "NCHW")
    y = jax.lax.conv_general_dilated(x[:, None], w1, (2, 2), "VALID",
                                     dimension_numbers=dn)
    y = jnp.maximum(y + b1[None, :, None, None], 0.0)
    y = jax.lax.conv_general_dilated(y, w2, (2, 2), "VALID",
                                     dimension_numbers=dn)
    y = jnp.maximum(y + b2[None, :, None, None], 0.0)
    B, D, T2, F2 = y.shape
    return jnp.transpose(y, (0, 2, 1, 3)).reshape(B, T2, D * F2)


def _make_params(key, d_hidden):
    kw1, kb1, kw2, kb2 = jax.random.split(key, 4)
    bound1 = 1.0 / np.sqrt(1 * 3 * 3)
    w1 = jax.random.uniform(kw1, (d_hidden, 1, 3, 3), jnp.float32, -bound1, bound1)
    b1 = jax.random.uniform(kb1, (d_hidden,), jnp.float32, -bound1, bound1)
    bound2 = 1.0 / np.sqrt(d_hidden * 3 * 3)
    w2 = jax.random.uniform(kw2, (d_hidden, d_hidden, 3, 3), jnp.float32,
                            -bound2, bound2)
    b2 = jax.random.uniform(kb2, (d_hidden,), jnp.float32, -bound2, bound2)
    return w1, b1, w2, b2


if __name__ == "__main__":
    key = jax.random.PRNGKey(0)
    k_small, k_big, kx1, kx2 = jax.random.split(key, 4)

    # --- small shape: validate both conv1 code paths and the tiled grid -----
    w1, b1, w2, b2 = _make_params(k_small, 32)
    x = jax.random.normal(kx1, (2, 16, 16), jnp.float32)
    ref = jax.block_until_ready(_ref_forward(x, w1, b1, w2, b2))
    for on_mxu in (True, False):
        out = jax.block_until_ready(
            conv2d_subsampling(x, w1, b1, w2, b2, tile_t2=2, conv1_on_mxu=on_mxu))
        assert out.shape == ref.shape, (out.shape, ref.shape)
        np.testing.assert_allclose(np.asarray(out), np.asarray(ref),
                                   rtol=2e-2, atol=2e-2)

    # --- module-default width (D=144 -> D_pad=256), multi-tile, auto path ---
    w1, b1, w2, b2 = _make_params(k_big, 144)
    x = jax.random.normal(kx2, (1, 64, 40), jnp.float32)
    ref = jax.block_until_ready(_ref_forward(x, w1, b1, w2, b2))
    out = jax.block_until_ready(conv2d_subsampling(x, w1, b1, w2, b2, tile_t2=8))
    assert out.shape == ref.shape, (out.shape, ref.shape)
    np.testing.assert_allclose(np.asarray(out), np.asarray(ref),
                               rtol=2e-2, atol=2e-2)

    print("KERNEL_OK")
</pallas_src>

<mosaic_0001>
module attributes {stable_mosaic.version = 11 : i64} {
  func.func @_fused_kernel(%arg0: i32, %arg1: i32, %arg2: memref<1x1x16x64xbf16, #tpu.memory_space<vmem>>, %arg3: memref<16x128xbf16, #tpu.memory_space<vmem>>, %arg4: memref<1x128xf32, #tpu.memory_space<vmem>>, %arg5: memref<9x128x128xbf16, #tpu.memory_space<vmem>>, %arg6: memref<1x128xf32, #tpu.memory_space<vmem>>, %arg7: memref<1x8x128xf32, #tpu.memory_space<vmem>>) attributes {dimension_semantics = [#tpu.dimension_semantics<parallel>, #tpu.dimension_semantics<parallel>], iteration_bounds = array<i64: 2, 2>, scalar_prefetch = 0 : i64, scratch_operands = 0 : i64, tpu.core_type = #tpu.core_type<tc>, window_params = [{transform_indices = @transform_0, window_bounds = array<i64: 1, 1, 16, 64>}, {pipeline_mode = #tpu.pipeline_mode<synchronous>, transform_indices = @transform_1, window_bounds = array<i64: 16, 128>}, {pipeline_mode = #tpu.pipeline_mode<synchronous>, transform_indices = @transform_2, window_bounds = array<i64: 1, 128>}, {pipeline_mode = #tpu.pipeline_mode<synchronous>, transform_indices = @transform_3, window_bounds = array<i64: 9, 128, 128>}, {pipeline_mode = #tpu.pipeline_mode<synchronous>, transform_indices = @transform_4, window_bounds = array<i64: 1, 128>}, {transform_indices = @transform_5, window_bounds = array<i64: 1, 8, 128>}]} {
    %c0 = arith.constant 0 : index
    %c0_0 = arith.constant 0 : index
    %c0_1 = arith.constant 0 : index
    %c0_2 = arith.constant 0 : index
    %0 = vector.load %arg2[%c0, %c0_0, %c0_1, %c0_2] : memref<1x1x16x64xbf16, #tpu.memory_space<vmem>>, vector<1x1x16x64xbf16>
    %1 = vector.shape_cast %0 : vector<1x1x16x64xbf16> to vector<16x64xbf16>
    %c0_3 = arith.constant 0 : index
    %c0_4 = arith.constant 0 : index
    %2 = vector.load %arg3[%c0_3, %c0_4] : memref<16x128xbf16, #tpu.memory_space<vmem>>, vector<16x128xbf16>
    %c0_5 = arith.constant 0 : index
    %c0_6 = arith.constant 0 : index
    %3 = vector.load %arg4[%c0_5, %c0_6] : memref<1x128xf32, #tpu.memory_space<vmem>>, vector<1x128xf32>
    %c0_7 = arith.constant 0 : index
    %c0_8 = arith.constant 0 : index
    %4 = vector.load %arg6[%c0_7, %c0_8] : memref<1x128xf32, #tpu.memory_space<vmem>>, vector<1x128xf32>
    %5 = vector.shape_cast %4 : vector<1x128xf32> to vector<1x128xf32>
    %6 = vector.broadcast %5 : vector<1x128xf32> to vector<8x128xf32>
    %7 = vector.extract_strided_slice %1 {offsets = [0, 0], sizes = [16, 16], strides = [1, 1]} : vector<16x64xbf16> to vector<16x16xbf16>
    %cst = arith.constant dense<0.000000e+00> : vector<16x128xf32>
    %8 = tpu.matmul %7, %2, %cst {dimension_numbers = #tpu.dot_dimension_numbers<[1], [0], [0], [1], [0, 0, 1, 1], [], []>} : vector<16x16xbf16>, vector<16x128xbf16>, vector<16x128xf32> -> vector<16x128xf32>
    %9 = vector.broadcast %3 : vector<1x128xf32> to vector<16x128xf32>
    %10 = arith.addf %8, %9 : vector<16x128xf32>
    %cst_9 = arith.constant 0.000000e+00 : f32
    %11 = vector.broadcast %cst_9 : f32 to vector<16x128xf32>
    %12 = arith.maximumf %10, %11 : vector<16x128xf32>
    %13 = arith.truncf %12 : vector<16x128xf32> to vector<16x128xbf16>
    %14 = vector.extract_strided_slice %13 {offsets = [0, 0], sizes = [8, 128], strides = [1, 1]} : vector<16x128xbf16> to vector<8x128xbf16>
    %c0_10 = arith.constant 0 : index
    %c0_11 = arith.constant 0 : index
    %c0_12 = arith.constant 0 : index
    %15 = vector.load %arg5[%c0_10, %c0_11, %c0_12] : memref<9x128x128xbf16, #tpu.memory_space<vmem>>, vector<1x128x128xbf16>
    %16 = vector.shape_cast %15 : vector<1x128x128xbf16> to vector<128x128xbf16>
    %cst_13 = arith.constant dense<0.000000e+00> : vector<8x128xf32>
    %17 = tpu.matmul %14, %16, %cst_13 {dimension_numbers = #tpu.dot_dimension_numbers<[1], [0], [0], [1], [0, 0, 1, 1], [], []>} : vector<8x128xbf16>, vector<128x128xbf16>, vector<8x128xf32> -> vector<8x128xf32>
    %18 = arith.addf %6, %17 : vector<8x128xf32>
    %19 = vector.extract_strided_slice %13 {offsets = [1, 0], sizes = [8, 128], strides = [1, 1]} : vector<16x128xbf16> to vector<8x128xbf16>
    %c2 = arith.constant 2 : index
    %c0_14 = arith.constant 0 : index
    %c0_15 = arith.constant 0 : index
    %20 = vector.load %arg5[%c2, %c0_14, %c0_15] : memref<9x128x128xbf16, #tpu.memory_space<vmem>>, vector<1x128x128xbf16>
    %21 = vector.shape_cast %20 : vector<1x128x128xbf16> to vector<128x128xbf16>
    %cst_16 = arith.constant dense<0.000000e+00> : vector<8x128xf32>
    %22 = tpu.matmul %19, %21, %cst_16 {dimension_numbers = #tpu.dot_dimension_numbers<[1], [0], [0], [1], [0, 0, 1, 1], [], []>} : vector<8x128xbf16>, vector<128x128xbf16>, vector<8x128xf32> -> vector<8x128xf32>
    %23 = arith.addf %18, %22 : vector<8x128xf32>
    %24 = vector.extract_strided_slice %13 {offsets = [4, 0], sizes = [8, 128], strides = [1, 1]} : vector<16x128xbf16> to vector<8x128xbf16>
    %c6 = arith.constant 6 : index
    %c0_17 = arith.constant 0 : index
    %c0_18 = arith.constant 0 : index
    %25 = vector.load %arg5[%c6, %c0_17, %c0_18] : memref<9x128x128xbf16, #tpu.memory_space<vmem>>, vector<1x128x128xbf16>
    %26 = vector.shape_cast %25 : vector<1x128x128xbf16> to vector<128x128xbf16>
    %cst_19 = arith.constant dense<0.000000e+00> : vector<8x128xf32>
    %27 = tpu.matmul %24, %26, %cst_19 {dimension_numbers = #tpu.dot_dimension_numbers<[1], [0], [0], [1], [0, 0, 1, 1], [], []>} : vector<8x128xbf16>, vector<128x128xbf16>, vector<8x128xf32> -> vector<8x128xf32>
    %28 = arith.addf %23, %27 : vector<8x128xf32>
    %29 = vector.extract_strided_slice %13 {offsets = [5, 0], sizes = [8, 128], strides = [1, 1]} : vector<16x128xbf16> to vector<8x128xbf16>
    %c8 = arith.constant 8 : index
    %c0_20 = arith.constant 0 : index
    %c0_21 = arith.constant 0 : index
    %30 = vector.load %arg5[%c8, %c0_20, %c0_21] : memref<9x128x128xbf16, #tpu.memory_space<vmem>>, vector<1x128x128xbf16>
    %31 = vector.shape_cast %30 : vector<1x128x128xbf16> to vector<128x128xbf16>
    %cst_22 = arith.constant dense<0.000000e+00> : vector<8x128xf32>
    %32 = tpu.matmul %29, %31, %cst_22 {dimension_numbers = #tpu.dot_dimension_numbers<[1], [0], [0], [1], [0, 0, 1, 1], [], []>} : vector<8x128xbf16>, vector<128x128xbf16>, vector<8x128xf32> -> vector<8x128xf32>
    %33 = arith.addf %28, %32 : vector<8x128xf32>
    %34 = vector.extract_strided_slice %1 {offsets = [0, 16], sizes = [16, 16], strides = [1, 1]} : vector<16x64xbf16> to vector<16x16xbf16>
    %cst_23 = arith.constant dense<0.000000e+00> : vector<16x128xf32>
    %35 = tpu.matmul %34, %2, %cst_23 {dimension_numbers = #tpu.dot_dimension_numbers<[1], [0], [0], [1], [0, 0, 1, 1], [], []>} : vector<16x16xbf16>, vector<16x128xbf16>, vector<16x128xf32> -> vector<16x128xf32>
    %36 = vector.broadcast %3 : vector<1x128xf32> to vector<16x128xf32>
    %37 = arith.addf %35, %36 : vector<16x128xf32>
    %cst_24 = arith.constant 0.000000e+00 : f32
    %38 = vector.broadcast %cst_24 : f32 to vector<16x128xf32>
    %39 = arith.maximumf %37, %38 : vector<16x128xf32>
    %40 = arith.truncf %39 : vector<16x128xf32> to vector<16x128xbf16>
    %41 = vector.extract_strided_slice %40 {offsets = [0, 0], sizes = [8, 128], strides = [1, 1]} : vector<16x128xbf16> to vector<8x128xbf16>
    %c1 = arith.constant 1 : index
    %c0_25 = arith.constant 0 : index
    %c0_26 = arith.constant 0 : index
    %42 = vector.load %arg5[%c1, %c0_25, %c0_26] : memref<9x128x128xbf16, #tpu.memory_space<vmem>>, vector<1x128x128xbf16>
    %43 = vector.shape_cast %42 : vector<1x128x128xbf16> to vector<128x128xbf16>
    %cst_27 = arith.constant dense<0.000000e+00> : vector<8x128xf32>
    %44 = tpu.matmul %41, %43, %cst_27 {dimension_numbers = #tpu.dot_dimension_numbers<[1], [0], [0], [1], [0, 0, 1, 1], [], []>} : vector<8x128xbf16>, vector<128x128xbf16>, vector<8x128xf32> -> vector<8x128xf32>
    %45 = arith.addf %33, %44 : vector<8x128xf32>
    %46 = vector.extract_strided_slice %40 {offsets = [4, 0], sizes = [8, 128], strides = [1, 1]} : vector<16x128xbf16> to vector<8x128xbf16>
    %c7 = arith.constant 7 : index
    %c0_28 = arith.constant 0 : index
    %c0_29 = arith.constant 0 : index
    %47 = vector.load %arg5[%c7, %c0_28, %c0_29] : memref<9x128x128xbf16, #tpu.memory_space<vmem>>, vector<1x128x128xbf16>
    %48 = vector.shape_cast %47 : vector<1x128x128xbf16> to vector<128x128xbf16>
    %cst_30 = arith.constant dense<0.000000e+00> : vector<8x128xf32>
    %49 = tpu.matmul %46, %48, %cst_30 {dimension_numbers = #tpu.dot_dimension_numbers<[1], [0], [0], [1], [0, 0, 1, 1], [], []>} : vector<8x128xbf16>, vector<128x128xbf16>, vector<8x128xf32> -> vector<8x128xf32>
    %50 = arith.addf %45, %49 : vector<8x128xf32>
    %51 = vector.extract_strided_slice %1 {offsets = [0, 32], sizes = [16, 16], strides = [1, 1]} : vector<16x64xbf16> to vector<16x16xbf16>
    %cst_31 = arith.constant dense<0.000000e+00> : vector<16x128xf32>
    %52 = tpu.matmul %51, %2, %cst_31 {dimension_numbers = #tpu.dot_dimension_numbers<[1], [0], [0], [1], [0, 0, 1, 1], [], []>} : vector<16x16xbf16>, vector<16x128xbf16>, vector<16x128xf32> -> vector<16x128xf32>
    %53 = vector.broadcast %3 : vector<1x128xf32> to vector<16x128xf32>
    %54 = arith.addf %52, %53 : vector<16x128xf32>
    %cst_32 = arith.constant 0.000000e+00 : f32
    %55 = vector.broadcast %cst_32 : f32 to vector<16x128xf32>
    %56 = arith.maximumf %54, %55 : vector<16x128xf32>
    %57 = arith.truncf %56 : vector<16x128xf32> to vector<16x128xbf16>
    %58 = vector.extract_strided_slice %57 {offsets = [0, 0], sizes = [8, 128], strides = [1, 1]} : vector<16x128xbf16> to vector<8x128xbf16>
    %c3 = arith.constant 3 : index
    %c0_33 = arith.constant 0 : index
    %c0_34 = arith.constant 0 : index
    %59 = vector.load %arg5[%c3, %c0_33, %c0_34] : memref<9x128x128xbf16, #tpu.memory_space<vmem>>, vector<1x128x128xbf16>
    %60 = vector.shape_cast %59 : vector<1x128x128xbf16> to vector<128x128xbf16>
    %cst_35 = arith.constant dense<0.000000e+00> : vector<8x128xf32>
    %61 = tpu.matmul %58, %60, %cst_35 {dimension_numbers = #tpu.dot_dimension_numbers<[1], [0], [0], [1], [0, 0, 1, 1], [], []>} : vector<8x128xbf16>, vector<128x128xbf16>, vector<8x128xf32> -> vector<8x128xf32>
    %62 = arith.addf %50, %61 : vector<8x128xf32>
    %63 = vector.extract_strided_slice %57 {offsets = [1, 0], sizes = [8, 128], strides = [1, 1]} : vector<16x128xbf16> to vector<8x128xbf16>
    %c5 = arith.constant 5 : index
    %c0_36 = arith.constant 0 : index
    %c0_37 = arith.constant 0 : index
    %64 = vector.load %arg5[%c5, %c0_36, %c0_37] : memref<9x128x128xbf16, #tpu.memory_space<vmem>>, vector<1x128x128xbf16>
    %65 = vector.shape_cast %64 : vector<1x128x128xbf16> to vector<128x128xbf16>
    %cst_38 = arith.constant dense<0.000000e+00> : vector<8x128xf32>
    %66 = tpu.matmul %63, %65, %cst_38 {dimension_numbers = #tpu.dot_dimension_numbers<[1], [0], [0], [1], [0, 0, 1, 1], [], []>} : vector<8x128xbf16>, vector<128x128xbf16>, vector<8x128xf32> -> vector<8x128xf32>
    %67 = arith.addf %62, %66 : vector<8x128xf32>
    %68 = vector.extract_strided_slice %1 {offsets = [0, 48], sizes = [16, 16], strides = [1, 1]} : vector<16x64xbf16> to vector<16x16xbf16>
    %cst_39 = arith.constant dense<0.000000e+00> : vector<16x128xf32>
    %69 = tpu.matmul %68, %2, %cst_39 {dimension_numbers = #tpu.dot_dimension_numbers<[1], [0], [0], [1], [0, 0, 1, 1], [], []>} : vector<16x16xbf16>, vector<16x128xbf16>, vector<16x128xf32> -> vector<16x128xf32>
    %70 = vector.broadcast %3 : vector<1x128xf32> to vector<16x128xf32>
    %71 = arith.addf %69, %70 : vector<16x128xf32>
    %cst_40 = arith.constant 0.000000e+00 : f32
    %72 = vector.broadcast %cst_40 : f32 to vector<16x128xf32>
    %73 = arith.maximumf %71, %72 : vector<16x128xf32>
    %74 = arith.truncf %73 : vector<16x128xf32> to vector<16x128xbf16>
    %75 = vector.extract_strided_slice %74 {offsets = [0, 0], sizes = [8, 128], strides = [1, 1]} : vector<16x128xbf16> to vector<8x128xbf16>
    %c4 = arith.constant 4 : index
    %c0_41 = arith.constant 0 : index
    %c0_42 = arith.constant 0 : index
    %76 = vector.load %arg5[%c4, %c0_41, %c0_42] : memref<9x128x128xbf16, #tpu.memory_space<vmem>>, vector<1x128x128xbf16>
    %77 = vector.shape_cast %76 : vector<1x128x128xbf16> to vector<128x128xbf16>
    %cst_43 = arith.constant dense<0.000000e+00> : vector<8x128xf32>
    %78 = tpu.matmul %75, %77, %cst_43 {dimension_numbers = #tpu.dot_dimension_numbers<[1], [0], [0], [1], [0, 0, 1, 1], [], []>} : vector<8x128xbf16>, vector<128x128xbf16>, vector<8x128xf32> -> vector<8x128xf32>
    %79 = arith.addf %67, %78 : vector<8x128xf32>
    %cst_44 = arith.constant 0.000000e+00 : f32
    %80 = vector.broadcast %cst_44 : f32 to vector<8x128xf32>
    %81 = arith.maximumf %79, %80 : vector<8x128xf32>
    %c0_45 = arith.constant 0 : index
    %c0_46 = arith.constant 0 : index
    %c0_47 = arith.constant 0 : index
    %82 = vector.load %arg7[%c0_45, %c0_46, %c0_47] : memref<1x8x128xf32, #tpu.memory_space<vmem>>, vector<1x8x128xf32>
    %83 = vector.shape_cast %82 : vector<1x8x128xf32> to vector<8x128xf32>
    %84 = vector.shape_cast %81 : vector<8x128xf32> to vector<1x8x128xf32>
    tpu.vector_store %arg7[%c0_45, %c0_46, %c0_47], %84 {strides = array<i32>} : memref<1x8x128xf32, #tpu.memory_space<vmem>>, vector<1x8x128xf32>,
    return
  }
  func.func @transform_0(%arg0: i32, %arg1: i32) -> (i32, i32, i32, i32) {
    %c0_i32 = arith.constant 0 : i32
    %c0_i32_0 = arith.constant 0 : i32
    %c0_i32_1 = arith.constant 0 : i32
    return %arg0, %arg1, %c0_i32, %c0_i32_0 : i32, i32, i32, i32
  }
  func.func @transform_1(%arg0: i32, %arg1: i32) -> (i32, i32) {
    %c0_i32 = arith.constant 0 : i32
    %c0_i32_0 = arith.constant 0 : i32
    %c0_i32_1 = arith.constant 0 : i32
    return %c0_i32, %c0_i32_0 : i32, i32
  }
  func.func @transform_2(%arg0: i32, %arg1: i32) -> (i32, i32) {
    %c0_i32 = arith.constant 0 : i32
    %c0_i32_0 = arith.constant 0 : i32
    %c0_i32_1 = arith.constant 0 : i32
    return %c0_i32, %c0_i32_0 : i32, i32
  }
  func.func @transform_3(%arg0: i32, %arg1: i32) -> (i32, i32, i32) {
    %c0_i32 = arith.constant 0 : i32
    %c0_i32_0 = arith.constant 0 : i32
    %c0_i32_1 = arith.constant 0 : i32
    %c0_i32_2 = arith.constant 0 : i32
    return %c0_i32, %c0_i32_0, %c0_i32_1 : i32, i32, i32
  }
  func.func @transform_4(%arg0: i32, %arg1: i32) -> (i32, i32) {
    %c0_i32 = arith.constant 0 : i32
    %c0_i32_0 = arith.constant 0 : i32
    %c0_i32_1 = arith.constant 0 : i32
    return %c0_i32, %c0_i32_0 : i32, i32
  }
  func.func @transform_5(%arg0: i32, %arg1: i32) -> (i32, i32, i32) {
    %c0_i32 = arith.constant 0 : i32
    %c0_i32_0 = arith.constant 0 : i32
    return %arg0, %arg1, %c0_i32 : i32, i32, i32
  }
}

</mosaic_0001>

<llo_original>
// kernel: _forward.1
$region0: #{_forward.1}
  #allocation0 [shape = 'u32[]', space=smem, size = 0x4, offset = 0x4, fixed_abs, tag = 'smem constant byte address 0x4 - core index']
  #allocation1 [shape = 'u32[144,128]{1,0:T(1,128)}', space=vmem, size = 0x12000, scoped, tag = 'internal scratch']
  %s0 = inlined_call_operand.vmem [shape: bf16[2,2,16,64], index: 0, kind: input, shape index: {}]
  %s1 = inlined_call_operand.vmem [shape: bf16[16,128], index: 1, kind: input, shape index: {}]
  %s2 = inlined_call_operand.vmem [shape: f32[1,128], index: 2, kind: input, shape index: {}]
  %s3 = inlined_call_operand.vmem [shape: bf16[9,128,128], index: 3, kind: input, shape index: {}]
  %s4 = inlined_call_operand.vmem [shape: f32[1,128], index: 4, kind: input, shape index: {}]
  %s5 = inlined_call_operand.vmem [shape: f32[2,16,128], index: 5, kind: output, shape index: {}]
  %s6 = sld [smem:[#allocation0]]
  $region53: #{_forward.1} parent=0
    _
  %s8 = ssub.s32 1, %s6
  %s9 = scalar_select 0, %s8, %s6
  loop: start=0, step=1, limit=6
  $region2: #{_forward.1} parent=0 // loop_pre_header
    _
  $region3: #{_forward.1} parent=0 // loop_header
    %s11 = sphi 0, %s15
    %p12 = scmp.ge.s32.totalorder %s11, 6
    %s18 = sphi 0, %s30
    %s19 = sphi 0, %s26
    %s20 = sphi 0, %s18
    %s21 = sphi 0, %s19
    %s22 = sphi 0, %s20
    %s23 = sphi 0, %s21
    %s35 = sphi 0, %s37
    %s38 = sphi 0, %s35
    %s39 = sphi 0, %s38
    %s55 = sphi 0, %s39
    %s59 = sphi 0, %s59
    %s61 = sphi 0, %s59
    %s62 = sphi 0, %s61
    %s76 = sphi 0, %s62
    %s80 = sphi 0, %s80
    %s82 = sphi 0, %s80
    %s83 = sphi 0, %s82
    %s97 = sphi 0, %s83
    %s101 = sphi 0, %s101
    %s103 = sphi 0, %s101
    %s104 = sphi 0, %s103
    %s118 = sphi 0, %s104
    %s122 = sphi 0, %s122
    %s124 = sphi 0, %s122
    %s125 = sphi 0, %s124
    %s139 = sphi 0, %s125
    %s147 = sphi 0, %s149
    %s150 = sphi 0, %s147
    %s151 = sphi 0, %s150
    %s167 = sphi 0, %s151
  $region4: #{_forward.1} parent=0 // loop_header_branch
    %14 = sbr.rel (%p12) target = $region8
  $region5: #{_forward.1} parent=0 // loop_body
    %s16 = ssub.s32 %s11, 1
    %s17 = ssub.s32 %s11, 2
    %s24 = sadd.s32 1, %s19
    %p25 = scmp.ge.s32.totalorder %s24, 2
    %s26 = scalar_select %p25, 0, %s24
    %s27 = sadd.s32 1, %s18
    %s28 = scalar_select %p25, %s27, %s18
    %p29 = scmp.ge.s32.totalorder %s28, 2
    %s30 = scalar_select %p29, 0, %s28
    %s31 = ssub.s32 %s18, %s30
    %s32 = ssub.s32 %s19, %s26
    %s33 = sor.u32 %s31, %s32
    %p34 = scmp.eq.s32.totalorder %s33, 0
    %s36 = sadd.s32 %s35, 1
    %s37 = scalar_select %p34, %s35, %s36
    %p40 = pneg %p34
    %p41 = scmp.eq.s32.totalorder %s11, 3
    %p42 = por %p40, %p41
    %p43 = scmp.ne.s32.totalorder %s35, %s38
    %p44 = scmp.eq.s32.totalorder %s11, 0
    %p45 = por %p43, %p44
    %p46 = scmp.ne.s32.totalorder %s35, %s38
    %p47 = scmp.eq.s32.totalorder %s16, 3
    %p48 = por %p46, %p47
    %p49 = scmp.ne.s32.totalorder %s38, %s39
    %p50 = scmp.eq.s32.totalorder %s16, 0
    %p51 = por %p49, %p50
    %p52 = scmp.ne.s32.totalorder %s38, %s39
    %p53 = scmp.eq.s32.totalorder %s17, 3
    %p54 = por %p52, %p53
    %p56 = scmp.ne.s32.totalorder %s39, %s55
    %p57 = scmp.eq.s32.totalorder %s17, 0
    %p58 = por %p56, %p57
    %s60 = sadd.s32 %s59, 1
    %p63 = scmp.eq.s32.totalorder %s11, 3
    %p64 = scmp.ne.s32.totalorder %s59, %s61
    %p65 = scmp.eq.s32.totalorder %s11, 0
    %p66 = por %p64, %p65
    %p67 = scmp.ne.s32.totalorder %s59, %s61
    %p68 = scmp.eq.s32.totalorder %s16, 3
    %p69 = por %p67, %p68
    %p70 = scmp.ne.s32.totalorder %s61, %s62
    %p71 = scmp.eq.s32.totalorder %s16, 0
    %p72 = por %p70, %p71
    %p73 = scmp.ne.s32.totalorder %s61, %s62
    %p74 = scmp.eq.s32.totalorder %s17, 3
    %p75 = por %p73, %p74
    %p77 = scmp.ne.s32.totalorder %s62, %s76
    %p78 = scmp.eq.s32.totalorder %s17, 0
    %p79 = por %p77, %p78
    %s81 = sadd.s32 %s80, 1
    %p84 = scmp.eq.s32.totalorder %s11, 3
    %p85 = scmp.ne.s32.totalorder %s80, %s82
    %p86 = scmp.eq.s32.totalorder %s11, 0
    %p87 = por %p85, %p86
    %p88 = scmp.ne.s32.totalorder %s80, %s82
    %p89 = scmp.eq.s32.totalorder %s16, 3
    %p90 = por %p88, %p89
    %p91 = scmp.ne.s32.totalorder %s82, %s83
    %p92 = scmp.eq.s32.totalorder %s16, 0
    %p93 = por %p91, %p92
    %p94 = scmp.ne.s32.totalorder %s82, %s83
    %p95 = scmp.eq.s32.totalorder %s17, 3
    %p96 = por %p94, %p95
    %p98 = scmp.ne.s32.totalorder %s83, %s97
    %p99 = scmp.eq.s32.totalorder %s17, 0
    %p100 = por %p98, %p99
    %s102 = sadd.s32 %s101, 1
    %p105 = scmp.eq.s32.totalorder %s11, 3
    %p106 = scmp.ne.s32.totalorder %s101, %s103
    %p107 = scmp.eq.s32.totalorder %s11, 0
    %p108 = por %p106, %p107
    %p109 = scmp.ne.s32.totalorder %s101, %s103
    %p110 = scmp.eq.s32.totalorder %s16, 3
    %p111 = por %p109, %p110
    %p112 = scmp.ne.s32.totalorder %s103, %s104
    %p113 = scmp.eq.s32.totalorder %s16, 0
    %p114 = por %p112, %p113
    %p115 = scmp.ne.s32.totalorder %s103, %s104
    %p116 = scmp.eq.s32.totalorder %s17, 3
    %p117 = por %p115, %p116
    %p119 = scmp.ne.s32.totalorder %s104, %s118
    %p120 = scmp.eq.s32.totalorder %s17, 0
    %p121 = por %p119, %p120
    %s123 = sadd.s32 %s122, 1
    %p126 = scmp.eq.s32.totalorder %s11, 3
    %p127 = scmp.ne.s32.totalorder %s122, %s124
    %p128 = scmp.eq.s32.totalorder %s11, 0
    %p129 = por %p127, %p128
    %p130 = scmp.ne.s32.totalorder %s122, %s124
    %p131 = scmp.eq.s32.totalorder %s16, 3
    %p132 = por %p130, %p131
    %p133 = scmp.ne.s32.totalorder %s124, %s125
    %p134 = scmp.eq.s32.totalorder %s16, 0
    %p135 = por %p133, %p134
    %p136 = scmp.ne.s32.totalorder %s124, %s125
    %p137 = scmp.eq.s32.totalorder %s17, 3
    %p138 = por %p136, %p137
    %p140 = scmp.ne.s32.totalorder %s125, %s139
    %p141 = scmp.eq.s32.totalorder %s17, 0
    %p142 = por %p140, %p141
    %s143 = ssub.s32 %s18, %s30
    %s144 = ssub.s32 %s19, %s26
    %s145 = sor.u32 %s143, %s144
    %p146 = scmp.eq.s32.totalorder %s145, 0
    %s148 = sadd.s32 %s147, 1
    %s149 = scalar_select %p146, %s147, %s148
    %p152 = pneg %p146
    %p153 = scmp.eq.s32.totalorder %s11, 3
    %p154 = por %p152, %p153
    %p155 = scmp.ne.s32.totalorder %s147, %s150
    %p156 = scmp.eq.s32.totalorder %s11, 0
    %p157 = por %p155, %p156
    %p158 = scmp.ne.s32.totalorder %s147, %s150
    %p159 = scmp.eq.s32.totalorder %s16, 3
    %p160 = por %p158, %p159
    %p161 = scmp.ne.s32.totalorder %s150, %s151
    %p162 = scmp.eq.s32.totalorder %s16, 0
    %p163 = por %p161, %p162
    %p164 = scmp.ne.s32.totalorder %s150, %s151
    %p165 = scmp.eq.s32.totalorder %s17, 3
    %p166 = por %p164, %p165
    %p168 = scmp.ne.s32.totalorder %s151, %s167
    %p169 = scmp.eq.s32.totalorder %s17, 0
    %p170 = por %p168, %p169
    %p171 = scmp.le.s32.totalorder 1, %s11
    %p172 = scmp.lt.s32.totalorder %s11, 5
    %p173 = pnand %p171, %p172
    %p174 = pneg %p173
    // Predicated region
    $region9: #{_forward.1} parent=5 // pred_check
      _
    $region10: #{_forward.1} parent=5 // pred_check_branch
      %176 = sbr.rel (%p173) target = $region12
    $region11: #{_forward.1} parent=5 // pred_region
      %s177 = ssub.s32 %s11, 1
      // Predicated region
      $region13: #{_forward.1} parent=11 // pred_check
        %p178 = pneg %p72
      $region14: #{_forward.1} parent=11 // pred_check_branch
        %180 = sbr.rel (%p178) target = $region16
      $region15: #{_forward.1} parent=11 // pred_region
        _
      $region16: #{_forward.1} parent=11 // pred_fallthru
        _
      // Predicated region
      $region17: #{_forward.1} parent=11 // pred_check
        %p181 = pneg %p93
      $region18: #{_forward.1} parent=11 // pred_check_branch
        %183 = sbr.rel (%p181) target = $region20
      $region19: #{_forward.1} parent=11 // pred_region
        _
      $region20: #{_forward.1} parent=11 // pred_fallthru
        _
      // Predicated region
      $region21: #{_forward.1} parent=11 // pred_check
        %p184 = pneg %p114
      $region22: #{_forward.1} parent=11 // pred_check_branch
        %186 = sbr.rel (%p184) target = $region24
      $region23: #{_forward.1} parent=11 // pred_region
        _
      $region24: #{_forward.1} parent=11 // pred_fallthru
        _
      // Predicated region
      $region25: #{_forward.1} parent=11 // pred_check
        %p187 = pneg %p135
      $region26: #{_forward.1} parent=11 // pred_check_branch
        %189 = sbr.rel (%p187) target = $region28
      $region27: #{_forward.1} parent=11 // pred_region
        _
      $region28: #{_forward.1} parent=11 // pred_fallthru
        _
    $region12: #{_forward.1} parent=5 // pred_fallthru
      _
    %p190 = scmp.lt.s32.totalorder %s11, 4
    // Predicated region
    $region29: #{_forward.1} parent=5 // pred_check
      %p191 = pneg %p190
    $region30: #{_forward.1} parent=5 // pred_check_branch
      %193 = sbr.rel (%p191) target = $region32
    $region31: #{_forward.1} parent=5 // pred_region
      // Predicated region
      $region33: #{_forward.1} parent=31 // pred_check
        %p194 = pneg %p45
      $region34: #{_forward.1} parent=31 // pred_check_branch
        %196 = sbr.rel (%p194) target = $region36
      $region35: #{_forward.1} parent=31 // pred_region
        %p197 = scmp.lt.s32.totalorder %s18, 1
        %s198 = scalar_select %p197, %s18, 1
        %p199 = scmp.lt.s32.totalorder %s19, 1
        %s200 = scalar_select %p199, %s19, 1
        %s201 = smul.addr %s200, 2
        %s202 = smul.addr %s198, 4
        %s203 = sadd.s32 %s201, %s202
        %s204 = smul.addr %s203, 4
        %s205 = scalar_lea.vmem %s0, %s204
      $region36: #{_forward.1} parent=31 // pred_fallthru
        _
    $region32: #{_forward.1} parent=5 // pred_fallthru
      _
    %p206 = scmp.le.s32.totalorder 1, %s11
    %p207 = scmp.lt.s32.totalorder %s11, 5
    %p208 = pnand %p206, %p207
    %p209 = pneg %p208
    // Predicated region
    $region37: #{_forward.1} parent=5 // pred_check
      _
    $region38: #{_forward.1} parent=5 // pred_check_branch
      %211 = sbr.rel (%p208) target = $region40
    $region39: #{_forward.1} parent=5 // pred_region
      %s212 = ssub.s32 %s11, 1
      %p213 = scmp.lt.s32.totalorder %s20, 1
      %s214 = scalar_select %p213, %s20, 1
      %p215 = scmp.lt.s32.totalorder %s21, 1
      %s216 = scalar_select %p215, %s21, 1
      %s217 = smul.addr %s216, 2
      %s218 = smul.addr %s214, 4
      %s219 = sadd.s32 %s217, %s218
      %s220 = smul.addr %s219, 4
      %s221 = scalar_lea.vmem %s0, %s220
      %p222 = pneg %p51
      %p223 = pneg %p48
      %p224 = pneg %p72
      %p225 = pneg %p69
      %p226 = pneg %p93
      %p227 = pneg %p90
      %p228 = pneg %p114
      %p229 = pneg %p111
      %p230 = pneg %p135
      %p231 = pneg %p132
      %p232 = pneg %p163
      %p233 = pneg %p160
      %p234 = scmp.lt.s32.totalorder %s20, 1
      %s235 = scalar_select %p234, %s20, 1
      %p236 = scmp.lt.s32.totalorder %s21, 1
      %s237 = scalar_select %p236, %s21, 1
      %s238 = smul.addr %s235, 2
      %s239 = sadd.s32 %s237, %s238
      %s240 = smul.addr %s239, 8
      %s241 = scalar_lea.vmem %s5, %s240
      %p242 = scmp.lt.s32.totalorder %s20, 1
      %s243 = scalar_select %p242, %s20, 1
      %p244 = scmp.lt.s32.totalorder %s21, 1
      %s245 = scalar_select %p244, %s21, 1
      %s246 = smul.addr %s245, 2
      %s247 = smul.addr %s243, 4
      %s248 = sadd.s32 %s246, %s247
      %s249 = smul.addr %s248, 4
      %s250 = scalar_lea.vmem %s0, %s249
      %p251 = scmp.lt.s32.totalorder %s20, 1
      %s252 = scalar_select %p251, %s20, 1
      %p253 = scmp.lt.s32.totalorder %s21, 1
      %s254 = scalar_select %p253, %s21, 1
      %s255 = smul.addr %s252, 2
      %s256 = sadd.s32 %s254, %s255
      %s257 = smul.addr %s256, 8
      %s258 = scalar_lea.vmem %s5, %s257
      %v260 = vld [vmem:[%s250] sm:$0xf]
      %v261 = vld [vmem:[%s250 + $0x4] sm:$0xf]
      %v262 = vld [vmem:[%s1] sm:$0xf]
      %v263 = vld [vmem:[%s1 + $0x4] sm:$0xf]
      %v264 = vld [vmem:[%s2] sm:$0x1]
      %v265 = vld [vmem:[%s4] sm:$0x1]
      %v267 = vlaneseq
      %v268 = vshrl.u32 %v267, 7
      %v269 = vsub.s32 0, %v268
      %v270 = vrot.slane %v265, %v269
      %v273 = vlaneseq
      %v274 = vshrl.u32 %v273, 7
      %v275 = vsub.s32 0, %v274
      %v276 = vrot.slane %v264, %v275
      %v280 = vunpack.c.l.b16 %v260
      %v281 = vunpack.c.l.b16 %v261
      %v282 = vpack.c.b16 %v281, %v280
      %v285 = vunpack.c.l.b16 %v262
      %v286 = vunpack.c.l.b16 %v263
      %v287 = vpack.c.b16 %v286, %v285
      %vm289 = vcmask 130048
      %v291 = vsel %vm289, %v282, 0
      %293 = vmatprep.subr.bf16.mxu0 0
      %294 = vmatpush1.bf16.msra.mxu0 %v287
      %295 = vmatprep.subr.bf16.mxu0 0
      %296 = vmatpush1.bf16.msra.mxu0 0
      %297 = vmatprep.subr.bf16.mxu0 0
      %298 = vmatpush1.bf16.msra.mxu0 0
      %299 = vmatprep.subr.bf16.mxu0 0
      %300 = vmatpush1.bf16.msra.mxu0 0
      %301 = vmatprep.subr.bf16.mxu0 0
      %302 = vmatpush1.bf16.msra.mxu0 0
      %303 = vmatprep.subr.bf16.mxu0 0
      %304 = vmatpush1.bf16.msra.mxu0 0
      %305 = vmatprep.subr.bf16.mxu0 0
      %306 = vmatpush1.bf16.msra.mxu0 0
      %307 = vmatprep.subr.bf16.mxu0 0
      %308 = vmatpush1.bf16.msra.mxu0 0
      %309 = vmatprep.subr.bf16.mxu0 0
      %310 = vmatpush1.bf16.msra.mxu0 0
      %311 = vmatprep.subr.bf16.mxu0 0
      %312 = vmatpush1.bf16.msra.mxu0 0
      %313 = vmatprep.subr.bf16.mxu0 0
      %314 = vmatpush1.bf16.msra.mxu0 0
      %315 = vmatprep.subr.bf16.mxu0 0
      %316 = vmatpush1.bf16.msra.mxu0 0
      %317 = vmatprep.subr.bf16.mxu0 0
      %318 = vmatpush1.bf16.msra.mxu0 0
      %319 = vmatprep.subr.bf16.mxu0 0
      %320 = vmatpush1.bf16.msra.mxu0 0
      %321 = vmatprep.subr.bf16.mxu0 0
      %322 = vmatpush1.bf16.msra.mxu0 0
      %323 = vmatprep.subr.bf16.mxu0 0
      %324 = vmatpush1.bf16.msra.mxu0 0
      %325 = vmatprep.mubr.bf16.mxu0 0
      %326 = vmatmul.mubr.bf16.gmra.mrb[0].mxu0 %v291
      %v327 = vpop.f32.mrb[0].mxu0
      %v328 = vadd.f32 %v276, %v327
      %v329 = vpop.f32.mrb[0].mxu0
      %v330 = vpop.f32.mrb[0].mxu0
      %v331 = vadd.f32 %v276, %v330
      %v332 = vpop.f32.mrb[0].mxu0
      %333 = vdwg.mxu0
      %v334 = vmax.f32 %v328, 0.0
      %v335 = vmax.f32 %v331, 0.0
      %v336 = vpack.c.bf16 %v335, %v334
      %v337 = vld [vmem:[%s3] sm:$0xf]
      %v338 = vld [vmem:[%s3 + $0x4] sm:$0xf]
      %v339 = vld [vmem:[%s3 + $0x8] sm:$0xf]
      %v340 = vld [vmem:[%s3 + $0xc] sm:$0xf]
      %v341 = vld [vmem:[%s3 + $0x10] sm:$0xf]
      %v342 = vld [vmem:[%s3 + $0x14] sm:$0xf]
      %v343 = vld [vmem:[%s3 + $0x18] sm:$0xf]
      %v344 = vld [vmem:[%s3 + $0x1c] sm:$0xf]
      %v345 = vld [vmem:[%s3 + $0x20] sm:$0xf]
      %v346 = vld [vmem:[%s3 + $0x24] sm:$0xf]
      %v347 = vld [vmem:[%s3 + $0x28] sm:$0xf]
      %v348 = vld [vmem:[%s3 + $0x2c] sm:$0xf]
      %v349 = vld [vmem:[%s3 + $0x30] sm:$0xf]
      %v350 = vld [vmem:[%s3 + $0x34] sm:$0xf]
      %v351 = vld [vmem:[%s3 + $0x38] sm:$0xf]
      %v352 = vld [vmem:[%s3 + $0x3c] sm:$0xf]
      %v369 = vunpack.c.l.b16 %v337
      %v370 = vunpack.c.l.b16 %v338
      %v371 = vunpack.c.l.b16 %v339
      %v372 = vunpack.c.l.b16 %v340
      %v373 = vunpack.c.l.b16 %v341
      %v374 = vunpack.c.l.b16 %v342
      %v375 = vunpack.c.l.b16 %v343
      %v376 = vunpack.c.l.b16 %v344
      %v377 = vunpack.c.l.b16 %v345
      %v378 = vunpack.c.l.b16 %v346
      %v379 = vunpack.c.l.b16 %v347
      %v380 = vunpack.c.l.b16 %v348
      %v381 = vunpack.c.l.b16 %v349
      %v382 = vunpack.c.l.b16 %v350
      %v383 = vunpack.c.l.b16 %v351
      %v384 = vunpack.c.l.b16 %v352
      %v385 = vpack.c.b16 %v370, %v369
      %v386 = vpack.c.b16 %v372, %v371
      %v387 = vpack.c.b16 %v374, %v373
      %v388 = vpack.c.b16 %v376, %v375
      %v389 = vpack.c.b16 %v378, %v377
      %v390 = vpack.c.b16 %v380, %v379
      %v391 = vpack.c.b16 %v382, %v381
      %v392 = vpack.c.b16 %v384, %v383
      %401 = vmatprep.subr.bf16.mxu0 0
      %402 = vmatpush1.bf16.msra.mxu0 %v385
      %403 = vmatprep.subr.bf16.mxu0 0
      %404 = vmatpush1.bf16.msra.mxu0 %v386
      %405 = vmatprep.subr.bf16.mxu0 0
      %406 = vmatpush1.bf16.msra.mxu0 %v387
      %407 = vmatprep.subr.bf16.mxu0 0
      %408 = vmatpush1.bf16.msra.mxu0 %v388
      %409 = vmatprep.subr.bf16.mxu0 0
      %410 = vmatpush1.bf16.msra.mxu0 %v389
      %411 = vmatprep.subr.bf16.mxu0 0
      %412 = vmatpush1.bf16.msra.mxu0 %v390
      %413 = vmatprep.subr.bf16.mxu0 0
      %414 = vmatpush1.bf16.msra.mxu0 %v391
      %415 = vmatprep.subr.bf16.mxu0 0
      %416 = vmatpush1.bf16.msra.mxu0 %v392
      %417 = vmatprep.subr.bf16.mxu0 0
      %418 = vmatpush1.bf16.msra.mxu0 0
      %419 = vmatprep.subr.bf16.mxu0 0
      %420 = vmatpush1.bf16.msra.mxu0 0
      %421 = vmatprep.subr.bf16.mxu0 0
      %422 = vmatpush1.bf16.msra.mxu0 0
      %423 = vmatprep.subr.bf16.mxu0 0
      %424 = vmatpush1.bf16.msra.mxu0 0
      %425 = vmatprep.subr.bf16.mxu0 0
      %426 = vmatpush1.bf16.msra.mxu0 0
      %427 = vmatprep.subr.bf16.mxu0 0
      %428 = vmatpush1.bf16.msra.mxu0 0
      %429 = vmatprep.subr.bf16.mxu0 0
      %430 = vmatpush1.bf16.msra.mxu0 0
      %431 = vmatprep.subr.bf16.mxu0 0
      %432 = vmatpush1.bf16.msra.mxu0 0
      %433 = vmatprep.mubr.bf16.mxu0 0
      %434 = vmatmul.mubr.bf16.gmra.mrb[0].mxu0 %v336
      %v435 = vpop.f32.mrb[0].mxu0
      %v436 = vadd.f32 0.0, %v435
      %v437 = vpop.f32.mrb[0].mxu0
      %v438 = vpop.f32.mrb[0].mxu0
      %v439 = vpop.f32.mrb[0].mxu0
      %440 = vdwg.mxu0
      %v441 = vadd.f32 %v270, %v436
      %s442 = scalar_lea.vmem %s3, 128
      %v443 = vld [vmem:[%s442] sm:$0xf]
      %v444 = vld [vmem:[%s442 + $0x4] sm:$0xf]
      %v445 = vld [vmem:[%s442 + $0x8] sm:$0xf]
      %v446 = vld [vmem:[%s442 + $0xc] sm:$0xf]
      %v447 = vld [vmem:[%s442 + $0x10] sm:$0xf]
      %v448 = vld [vmem:[%s442 + $0x14] sm:$0xf]
      %v449 = vld [vmem:[%s442 + $0x18] sm:$0xf]
      %v450 = vld [vmem:[%s442 + $0x1c] sm:$0xf]
      %v451 = vld [vmem:[%s442 + $0x20] sm:$0xf]
      %v452 = vld [vmem:[%s442 + $0x24] sm:$0xf]
      %v453 = vld [vmem:[%s442 + $0x28] sm:$0xf]
      %v454 = vld [vmem:[%s442 + $0x2c] sm:$0xf]
      %v455 = vld [vmem:[%s442 + $0x30] sm:$0xf]
      %v456 = vld [vmem:[%s442 + $0x34] sm:$0xf]
      %v457 = vld [vmem:[%s442 + $0x38] sm:$0xf]
      %v458 = vld [vmem:[%s442 + $0x3c] sm:$0xf]
      %v460 = vshrl.u32 %v336, 16
      %v462 = vshll.u32 %v336, 16
      %v464 = vrot.slane %v462, 1
      %v465 = vor.u32 %v460, %v464
      %v483 = vunpack.c.l.b16 %v443
      %v484 = vunpack.c.l.b16 %v444
      %v485 = vunpack.c.l.b16 %v445
      %v486 = vunpack.c.l.b16 %v446
      %v487 = vunpack.c.l.b16 %v447
      %v488 = vunpack.c.l.b16 %v448
      %v489 = vunpack.c.l.b16 %v449
      %v490 = vunpack.c.l.b16 %v450
      %v491 = vunpack.c.l.b16 %v451
      %v492 = vunpack.c.l.b16 %v452
      %v493 = vunpack.c.l.b16 %v453
      %v494 = vunpack.c.l.b16 %v454
      %v495 = vunpack.c.l.b16 %v455
      %v496 = vunpack.c.l.b16 %v456
      %v497 = vunpack.c.l.b16 %v457
      %v498 = vunpack.c.l.b16 %v458
      %v499 = vpack.c.b16 %v484, %v483
      %v500 = vpack.c.b16 %v486, %v485
      %v501 = vpack.c.b16 %v488, %v487
      %v502 = vpack.c.b16 %v490, %v489
      %v503 = vpack.c.b16 %v492, %v491
      %v504 = vpack.c.b16 %v494, %v493
      %v505 = vpack.c.b16 %v496, %v495
      %v506 = vpack.c.b16 %v498, %v497
      %515 = vmatprep.subr.bf16.mxu0 0
      %516 = vmatpush1.bf16.msra.mxu0 %v499
      %517 = vmatprep.subr.bf16.mxu0 0
      %518 = vmatpush1.bf16.msra.mxu0 %v500
      %519 = vmatprep.subr.bf16.mxu0 0
      %520 = vmatpush1.bf16.msra.mxu0 %v501
      %521 = vmatprep.subr.bf16.mxu0 0
      %522 = vmatpush1.bf16.msra.mxu0 %v502
      %523 = vmatprep.subr.bf16.mxu0 0
      %524 = vmatpush1.bf16.msra.mxu0 %v503
      %525 = vmatprep.subr.bf16.mxu0 0
      %526 = vmatpush1.bf16.msra.mxu0 %v504
      %527 = vmatprep.subr.bf16.mxu0 0
      %528 = vmatpush1.bf16.msra.mxu0 %v505
      %529 = vmatprep.subr.bf16.mxu0 0
      %530 = vmatpush1.bf16.msra.mxu0 %v506
      %531 = vmatprep.subr.bf16.mxu0 0
      %532 = vmatpush1.bf16.msra.mxu0 0
      %533 = vmatprep.subr.bf16.mxu0 0
      %534 = vmatpush1.bf16.msra.mxu0 0
      %535 = vmatprep.subr.bf16.mxu0 0
      %536 = vmatpush1.bf16.msra.mxu0 0
      %537 = vmatprep.subr.bf16.mxu0 0
      %538 = vmatpush1.bf16.msra.mxu0 0
      %539 = vmatprep.subr.bf16.mxu0 0
      %540 = vmatpush1.bf16.msra.mxu0 0
      %541 = vmatprep.subr.bf16.mxu0 0
      %542 = vmatpush1.bf16.msra.mxu0 0
      %543 = vmatprep.subr.bf16.mxu0 0
      %544 = vmatpush1.bf16.msra.mxu0 0
      %545 = vmatprep.subr.bf16.mxu0 0
      %546 = vmatpush1.bf16.msra.mxu0 0
      %547 = vmatprep.mubr.bf16.mxu0 0
      %548 = vmatmul.mubr.bf16.gmra.mrb[0].mxu0 %v465
      %v549 = vpop.f32.mrb[0].mxu0
      %v550 = vadd.f32 0.0, %v549
      %v551 = vpop.f32.mrb[0].mxu0
      %v552 = vpop.f32.mrb[0].mxu0
      %v553 = vpop.f32.mrb[0].mxu0
      %554 = vdwg.mxu0
      %v555 = vadd.f32 %v441, %v550
      %s556 = scalar_lea.vmem %s3, 384
      %v557 = vld [vmem:[%s556] sm:$0xf]
      %v558 = vld [vmem:[%s556 + $0x4] sm:$0xf]
      %v559 = vld [vmem:[%s556 + $0x8] sm:$0xf]
      %v560 = vld [vmem:[%s556 + $0xc] sm:$0xf]
      %v561 = vld [vmem:[%s556 + $0x10] sm:$0xf]
      %v562 = vld [vmem:[%s556 + $0x14] sm:$0xf]
      %v563 = vld [vmem:[%s556 + $0x18] sm:$0xf]
      %v564 = vld [vmem:[%s556 + $0x1c] sm:$0xf]
      %v565 = vld [vmem:[%s556 + $0x20] sm:$0xf]
      %v566 = vld [vmem:[%s556 + $0x24] sm:$0xf]
      %v567 = vld [vmem:[%s556 + $0x28] sm:$0xf]
      %v568 = vld [vmem:[%s556 + $0x2c] sm:$0xf]
      %v569 = vld [vmem:[%s556 + $0x30] sm:$0xf]
      %v570 = vld [vmem:[%s556 + $0x34] sm:$0xf]
      %v571 = vld [vmem:[%s556 + $0x38] sm:$0xf]
      %v572 = vld [vmem:[%s556 + $0x3c] sm:$0xf]
      %v574 = vrot.slane %v336, 2
      %v592 = vunpack.c.l.b16 %v557
      %v593 = vunpack.c.l.b16 %v558
      %v594 = vunpack.c.l.b16 %v559
      %v595 = vunpack.c.l.b16 %v560
      %v596 = vunpack.c.l.b16 %v561
      %v597 = vunpack.c.l.b16 %v562
      %v598 = vunpack.c.l.b16 %v563
      %v599 = vunpack.c.l.b16 %v564
      %v600 = vunpack.c.l.b16 %v565
      %v601 = vunpack.c.l.b16 %v566
      %v602 = vunpack.c.l.b16 %v567
      %v603 = vunpack.c.l.b16 %v568
      %v604 = vunpack.c.l.b16 %v569
      %v605 = vunpack.c.l.b16 %v570
      %v606 = vunpack.c.l.b16 %v571
      %v607 = vunpack.c.l.b16 %v572
      %v608 = vpack.c.b16 %v593, %v592
      %v609 = vpack.c.b16 %v595, %v594
      %v610 = vpack.c.b16 %v597, %v596
      %v611 = vpack.c.b16 %v599, %v598
      %v612 = vpack.c.b16 %v601, %v600
      %v613 = vpack.c.b16 %v603, %v602
      %v614 = vpack.c.b16 %v605, %v604
      %v615 = vpack.c.b16 %v607, %v606
      %624 = vmatprep.subr.bf16.mxu0 0
      %625 = vmatpush1.bf16.msra.mxu0 %v608
      %626 = vmatprep.subr.bf16.mxu0 0
      %627 = vmatpush1.bf16.msra.mxu0 %v609
      %628 = vmatprep.subr.bf16.mxu0 0
      %629 = vmatpush1.bf16.msra.mxu0 %v610
      %630 = vmatprep.subr.bf16.mxu0 0
      %631 = vmatpush1.bf16.msra.mxu0 %v611
      %632 = vmatprep.subr.bf16.mxu0 0
      %633 = vmatpush1.bf16.msra.mxu0 %v612
      %634 = vmatprep.subr.bf16.mxu0 0
      %635 = vmatpush1.bf16.msra.mxu0 %v613
      %636 = vmatprep.subr.bf16.mxu0 0
      %637 = vmatpush1.bf16.msra.mxu0 %v614
      %638 = vmatprep.subr.bf16.mxu0 0
      %639 = vmatpush1.bf16.msra.mxu0 %v615
      %640 = vmatprep.subr.bf16.mxu0 0
      %641 = vmatpush1.bf16.msra.mxu0 0
      %642 = vmatprep.subr.bf16.mxu0 0
      %643 = vmatpush1.bf16.msra.mxu0 0
      %644 = vmatprep.subr.bf16.mxu0 0
      %645 = vmatpush1.bf16.msra.mxu0 0
      %646 = vmatprep.subr.bf16.mxu0 0
      %647 = vmatpush1.bf16.msra.mxu0 0
      %648 = vmatprep.subr.bf16.mxu0 0
      %649 = vmatpush1.bf16.msra.mxu0 0
      %650 = vmatprep.subr.bf16.mxu0 0
      %651 = vmatpush1.bf16.msra.mxu0 0
      %652 = vmatprep.subr.bf16.mxu0 0
      %653 = vmatpush1.bf16.msra.mxu0 0
      %654 = vmatprep.subr.bf16.mxu0 0
      %655 = vmatpush1.bf16.msra.mxu0 0
      %656 = vmatprep.mubr.bf16.mxu0 0
      %657 = vmatmul.mubr.bf16.gmra.mrb[0].mxu0 %v574
      %v658 = vpop.f32.mrb[0].mxu0
      %v659 = vadd.f32 0.0, %v658
      %v660 = vpop.f32.mrb[0].mxu0
      %v661 = vpop.f32.mrb[0].mxu0
      %v662 = vpop.f32.mrb[0].mxu0
      %663 = vdwg.mxu0
      %v664 = vadd.f32 %v555, %v659
      %s665 = scalar_lea.vmem %s3, 512
      %v666 = vld [vmem:[%s665] sm:$0xf]
      %v667 = vld [vmem:[%s665 + $0x4] sm:$0xf]
      %v668 = vld [vmem:[%s665 + $0x8] sm:$0xf]
      %v669 = vld [vmem:[%s665 + $0xc] sm:$0xf]
      %v670 = vld [vmem:[%s665 + $0x10] sm:$0xf]
      %v671 = vld [vmem:[%s665 + $0x14] sm:$0xf]
      %v672 = vld [vmem:[%s665 + $0x18] sm:$0xf]
      %v673 = vld [vmem:[%s665 + $0x1c] sm:$0xf]
      %v674 = vld [vmem:[%s665 + $0x20] sm:$0xf]
      %v675 = vld [vmem:[%s665 + $0x24] sm:$0xf]
      %v676 = vld [vmem:[%s665 + $0x28] sm:$0xf]
      %v677 = vld [vmem:[%s665 + $0x2c] sm:$0xf]
      %v678 = vld [vmem:[%s665 + $0x30] sm:$0xf]
      %v679 = vld [vmem:[%s665 + $0x34] sm:$0xf]
      %v680 = vld [vmem:[%s665 + $0x38] sm:$0xf]
      %v681 = vld [vmem:[%s665 + $0x3c] sm:$0xf]
      %v682 = vrot.slane %v460, 2
      %v683 = vrot.slane %v462, 3
      %v684 = vor.u32 %v682, %v683
      %v702 = vunpack.c.l.b16 %v666
      %v703 = vunpack.c.l.b16 %v667
      %v704 = vunpack.c.l.b16 %v668
      %v705 = vunpack.c.l.b16 %v669
      %v706 = vunpack.c.l.b16 %v670
      %v707 = vunpack.c.l.b16 %v671
      %v708 = vunpack.c.l.b16 %v672
      %v709 = vunpack.c.l.b16 %v673
      %v710 = vunpack.c.l.b16 %v674
      %v711 = vunpack.c.l.b16 %v675
      %v712 = vunpack.c.l.b16 %v676
      %v713 = vunpack.c.l.b16 %v677
      %v714 = vunpack.c.l.b16 %v678
      %v715 = vunpack.c.l.b16 %v679
      %v716 = vunpack.c.l.b16 %v680
      %v717 = vunpack.c.l.b16 %v681
      %v718 = vpack.c.b16 %v703, %v702
      %v719 = vpack.c.b16 %v705, %v704
      %v720 = vpack.c.b16 %v707, %v706
      %v721 = vpack.c.b16 %v709, %v708
      %v722 = vpack.c.b16 %v711, %v710
      %v723 = vpack.c.b16 %v713, %v712
      %v724 = vpack.c.b16 %v715, %v714
      %v725 = vpack.c.b16 %v717, %v716
      %734 = vmatprep.subr.bf16.mxu0 0
      %735 = vmatpush1.bf16.msra.mxu0 %v718
      %736 = vmatprep.subr.bf16.mxu0 0
      %737 = vmatpush1.bf16.msra.mxu0 %v719
      %738 = vmatprep.subr.bf16.mxu0 0
      %739 = vmatpush1.bf16.msra.mxu0 %v720
      %740 = vmatprep.subr.bf16.mxu0 0
      %741 = vmatpush1.bf16.msra.mxu0 %v721
      %742 = vmatprep.subr.bf16.mxu0 0
      %743 = vmatpush1.bf16.msra.mxu0 %v722
      %744 = vmatprep.subr.bf16.mxu0 0
      %745 = vmatpush1.bf16.msra.mxu0 %v723
      %746 = vmatprep.subr.bf16.mxu0 0
      %747 = vmatpush1.bf16.msra.mxu0 %v724
      %748 = vmatprep.subr.bf16.mxu0 0
      %749 = vmatpush1.bf16.msra.mxu0 %v725
      %750 = vmatprep.subr.bf16.mxu0 0
      %751 = vmatpush1.bf16.msra.mxu0 0
      %752 = vmatprep.subr.bf16.mxu0 0
      %753 = vmatpush1.bf16.msra.mxu0 0
      %754 = vmatprep.subr.bf16.mxu0 0
      %755 = vmatpush1.bf16.msra.mxu0 0
      %756 = vmatprep.subr.bf16.mxu0 0
      %757 = vmatpush1.bf16.msra.mxu0 0
      %758 = vmatprep.subr.bf16.mxu0 0
      %759 = vmatpush1.bf16.msra.mxu0 0
      %760 = vmatprep.subr.bf16.mxu0 0
      %761 = vmatpush1.bf16.msra.mxu0 0
      %762 = vmatprep.subr.bf16.mxu0 0
      %763 = vmatpush1.bf16.msra.mxu0 0
      %764 = vmatprep.subr.bf16.mxu0 0
      %765 = vmatpush1.bf16.msra.mxu0 0
      %766 = vmatprep.mubr.bf16.mxu0 0
      %767 = vmatmul.mubr.bf16.gmra.mrb[0].mxu0 %v684
      %v768 = vpop.f32.mrb[0].mxu0
      %v769 = vadd.f32 0.0, %v768
      %v770 = vpop.f32.mrb[0].mxu0
      %v771 = vpop.f32.mrb[0].mxu0
      %v772 = vpop.f32.mrb[0].mxu0
      %773 = vdwg.mxu0
      %v774 = vadd.f32 %v664, %v769
      %775 = vrot.lane.b32.xlu0 %v282, 112
      %v776 = vpop.permute.xlu0 %775
      %v778 = vsel %vm289, %v776, 0
      %780 = vmatprep.subr.bf16.mxu0 0
      %781 = vmatpush1.bf16.msra.mxu0 %v287
      %782 = vmatprep.subr.bf16.mxu0 0
      %783 = vmatpush1.bf16.msra.mxu0 0
      %784 = vmatprep.subr.bf16.mxu0 0
      %785 = vmatpush1.bf16.msra.mxu0 0
      %786 = vmatprep.subr.bf16.mxu0 0
      %787 = vmatpush1.bf16.msra.mxu0 0
      %788 = vmatprep.subr.bf16.mxu0 0
      %789 = vmatpush1.bf16.msra.mxu0 0
      %790 = vmatprep.subr.bf16.mxu0 0
      %791 = vmatpush1.bf16.msra.mxu0 0
      %792 = vmatprep.subr.bf16.mxu0 0
      %793 = vmatpush1.bf16.msra.mxu0 0
      %794 = vmatprep.subr.bf16.mxu0 0
      %795 = vmatpush1.bf16.msra.mxu0 0
      %796 = vmatprep.subr.bf16.mxu0 0
      %797 = vmatpush1.bf16.msra.mxu0 0
      %798 = vmatprep.subr.bf16.mxu0 0
      %799 = vmatpush1.bf16.msra.mxu0 0
      %800 = vmatprep.subr.bf16.mxu0 0
      %801 = vmatpush1.bf16.msra.mxu0 0
      %802 = vmatprep.subr.bf16.mxu0 0
      %803 = vmatpush1.bf16.msra.mxu0 0
      %804 = vmatprep.subr.bf16.mxu0 0
      %805 = vmatpush1.bf16.msra.mxu0 0
      %806 = vmatprep.subr.bf16.mxu0 0
      %807 = vmatpush1.bf16.msra.mxu0 0
      %808 = vmatprep.subr.bf16.mxu0 0
      %809 = vmatpush1.bf16.msra.mxu0 0
      %810 = vmatprep.subr.bf16.mxu0 0
      %811 = vmatpush1.bf16.msra.mxu0 0
      %812 = vmatprep.mubr.bf16.mxu0 0
      %813 = vmatmul.mubr.bf16.gmra.mrb[0].mxu0 %v778
      %v814 = vpop.f32.mrb[0].mxu0
      %v815 = vadd.f32 %v276, %v814
      %v816 = vpop.f32.mrb[0].mxu0
      %v817 = vpop.f32.mrb[0].mxu0
      %v818 = vadd.f32 %v276, %v817
      %v819 = vpop.f32.mrb[0].mxu0
      %820 = vdwg.mxu0
      %v821 = vmax.f32 %v815, 0.0
      %v822 = vmax.f32 %v818, 0.0
      %v823 = vpack.c.bf16 %v822, %v821
      %s824 = scalar_lea.vmem %s3, 64
      %v825 = vld [vmem:[%s824] sm:$0xf]
      %v826 = vld [vmem:[%s824 + $0x4] sm:$0xf]
      %v827 = vld [vmem:[%s824 + $0x8] sm:$0xf]
      %v828 = vld [vmem:[%s824 + $0xc] sm:$0xf]
      %v829 = vld [vmem:[%s824 + $0x10] sm:$0xf]
      %v830 = vld [vmem:[%s824 + $0x14] sm:$0xf]
      %v831 = vld [vmem:[%s824 + $0x18] sm:$0xf]
      %v832 = vld [vmem:[%s824 + $0x1c] sm:$0xf]
      %v833 = vld [vmem:[%s824 + $0x20] sm:$0xf]
      %v834 = vld [vmem:[%s824 + $0x24] sm:$0xf]
      %v835 = vld [vmem:[%s824 + $0x28] sm:$0xf]
      %v836 = vld [vmem:[%s824 + $0x2c] sm:$0xf]
      %v837 = vld [vmem:[%s824 + $0x30] sm:$0xf]
      %v838 = vld [vmem:[%s824 + $0x34] sm:$0xf]
      %v839 = vld [vmem:[%s824 + $0x38] sm:$0xf]
      %v840 = vld [vmem:[%s824 + $0x3c] sm:$0xf]
      %v857 = vunpack.c.l.b16 %v825
      %v858 = vunpack.c.l.b16 %v826
      %v859 = vunpack.c.l.b16 %v827
      %v860 = vunpack.c.l.b16 %v828
      %v861 = vunpack.c.l.b16 %v829
      %v862 = vunpack.c.l.b16 %v830
      %v863 = vunpack.c.l.b16 %v831
      %v864 = vunpack.c.l.b16 %v832
      %v865 = vunpack.c.l.b16 %v833
      %v866 = vunpack.c.l.b16 %v834
      %v867 = vunpack.c.l.b16 %v835
      %v868 = vunpack.c.l.b16 %v836
      %v869 = vunpack.c.l.b16 %v837
      %v870 = vunpack.c.l.b16 %v838
      %v871 = vunpack.c.l.b16 %v839
      %v872 = vunpack.c.l.b16 %v840
      %v873 = vpack.c.b16 %v858, %v857
      %v874 = vpack.c.b16 %v860, %v859
      %v875 = vpack.c.b16 %v862, %v861
      %v876 = vpack.c.b16 %v864, %v863
      %v877 = vpack.c.b16 %v866, %v865
      %v878 = vpack.c.b16 %v868, %v867
      %v879 = vpack.c.b16 %v870, %v869
      %v880 = vpack.c.b16 %v872, %v871
      %889 = vmatprep.subr.bf16.mxu0 0
      %890 = vmatpush1.bf16.msra.mxu0 %v873
      %891 = vmatprep.subr.bf16.mxu0 0
      %892 = vmatpush1.bf16.msra.mxu0 %v874
      %893 = vmatprep.subr.bf16.mxu0 0
      %894 = vmatpush1.bf16.msra.mxu0 %v875
      %895 = vmatprep.subr.bf16.mxu0 0
      %896 = vmatpush1.bf16.msra.mxu0 %v876
      %897 = vmatprep.subr.bf16.mxu0 0
      %898 = vmatpush1.bf16.msra.mxu0 %v877
      %899 = vmatprep.subr.bf16.mxu0 0
      %900 = vmatpush1.bf16.msra.mxu0 %v878
      %901 = vmatprep.subr.bf16.mxu0 0
      %902 = vmatpush1.bf16.msra.mxu0 %v879
      %903 = vmatprep.subr.bf16.mxu0 0
      %904 = vmatpush1.bf16.msra.mxu0 %v880
      %905 = vmatprep.subr.bf16.mxu0 0
      %906 = vmatpush1.bf16.msra.mxu0 0
      %907 = vmatprep.subr.bf16.mxu0 0
      %908 = vmatpush1.bf16.msra.mxu0 0
      %909 = vmatprep.subr.bf16.mxu0 0
      %910 = vmatpush1.bf16.msra.mxu0 0
      %911 = vmatprep.subr.bf16.mxu0 0
      %912 = vmatpush1.bf16.msra.mxu0 0
      %913 = vmatprep.subr.bf16.mxu0 0
      %914 = vmatpush1.bf16.msra.mxu0 0
      %915 = vmatprep.subr.bf16.mxu0 0
      %916 = vmatpush1.bf16.msra.mxu0 0
      %917 = vmatprep.subr.bf16.mxu0 0
      %918 = vmatpush1.bf16.msra.mxu0 0
      %919 = vmatprep.subr.bf16.mxu0 0
      %920 = vmatpush1.bf16.msra.mxu0 0
      %921 = vmatprep.mubr.bf16.mxu0 0
      %922 = vmatmul.mubr.bf16.gmra.mrb[0].mxu0 %v823
      %v923 = vpop.f32.mrb[0].mxu0
      %v924 = vadd.f32 0.0, %v923
      %v925 = vpop.f32.mrb[0].mxu0
      %v926 = vpop.f32.mrb[0].mxu0
      %v927 = vpop.f32.mrb[0].mxu0
      %928 = vdwg.mxu0
      %v929 = vadd.f32 %v774, %v924
      %s930 = scalar_lea.vmem %s3, 448
      %v931 = vld [vmem:[%s930] sm:$0xf]
      %v932 = vld [vmem:[%s930 + $0x4] sm:$0xf]
      %v933 = vld [vmem:[%s930 + $0x8] sm:$0xf]
      %v934 = vld [vmem:[%s930 + $0xc] sm:$0xf]
      %v935 = vld [vmem:[%s930 + $0x10] sm:$0xf]
      %v936 = vld [vmem:[%s930 + $0x14] sm:$0xf]
      %v937 = vld [vmem:[%s930 + $0x18] sm:$0xf]
      %v938 = vld [vmem:[%s930 + $0x1c] sm:$0xf]
      %v939 = vld [vmem:[%s930 + $0x20] sm:$0xf]
      %v940 = vld [vmem:[%s930 + $0x24] sm:$0xf]
      %v941 = vld [vmem:[%s930 + $0x28] sm:$0xf]
      %v942 = vld [vmem:[%s930 + $0x2c] sm:$0xf]
      %v943 = vld [vmem:[%s930 + $0x30] sm:$0xf]
      %v944 = vld [vmem:[%s930 + $0x34] sm:$0xf]
      %v945 = vld [vmem:[%s930 + $0x38] sm:$0xf]
      %v946 = vld [vmem:[%s930 + $0x3c] sm:$0xf]
      %v948 = vrot.slane %v823, 2
      %v966 = vunpack.c.l.b16 %v931
      %v967 = vunpack.c.l.b16 %v932
      %v968 = vunpack.c.l.b16 %v933
      %v969 = vunpack.c.l.b16 %v934
      %v970 = vunpack.c.l.b16 %v935
      %v971 = vunpack.c.l.b16 %v936
      %v972 = vunpack.c.l.b16 %v937
      %v973 = vunpack.c.l.b16 %v938
      %v974 = vunpack.c.l.b16 %v939
      %v975 = vunpack.c.l.b16 %v940
      %v976 = vunpack.c.l.b16 %v941
      %v977 = vunpack.c.l.b16 %v942
      %v978 = vunpack.c.l.b16 %v943
      %v979 = vunpack.c.l.b16 %v944
      %v980 = vunpack.c.l.b16 %v945
      %v981 = vunpack.c.l.b16 %v946
      %v982 = vpack.c.b16 %v967, %v966
      %v983 = vpack.c.b16 %v969, %v968
      %v984 = vpack.c.b16 %v971, %v970
      %v985 = vpack.c.b16 %v973, %v972
      %v986 = vpack.c.b16 %v975, %v974
      %v987 = vpack.c.b16 %v977, %v976
      %v988 = vpack.c.b16 %v979, %v978
      %v989 = vpack.c.b16 %v981, %v980
      %998 = vmatprep.subr.bf16.mxu0 0
      %999 = vmatpush1.bf16.msra.mxu0 %v982
      %1000 = vmatprep.subr.bf16.mxu0 0
      %1001 = vmatpush1.bf16.msra.mxu0 %v983
      %1002 = vmatprep.subr.bf16.mxu0 0
      %1003 = vmatpush1.bf16.msra.mxu0 %v984
      %1004 = vmatprep.subr.bf16.mxu0 0
      %1005 = vmatpush1.bf16.msra.mxu0 %v985
      %1006 = vmatprep.subr.bf16.mxu0 0
      %1007 = vmatpush1.bf16.msra.mxu0 %v986
      %1008 = vmatprep.subr.bf16.mxu0 0
      %1009 = vmatpush1.bf16.msra.mxu0 %v987
      %1010 = vmatprep.subr.bf16.mxu0 0
      %1011 = vmatpush1.bf16.msra.mxu0 %v988
      %1012 = vmatprep.subr.bf16.mxu0 0
      %1013 = vmatpush1.bf16.msra.mxu0 %v989
      %1014 = vmatprep.subr.bf16.mxu0 0
      %1015 = vmatpush1.bf16.msra.mxu0 0
      %1016 = vmatprep.subr.bf16.mxu0 0
      %1017 = vmatpush1.bf16.msra.mxu0 0
      %1018 = vmatprep.subr.bf16.mxu0 0
      %1019 = vmatpush1.bf16.msra.mxu0 0
      %1020 = vmatprep.subr.bf16.mxu0 0
      %1021 = vmatpush1.bf16.msra.mxu0 0
      %1022 = vmatprep.subr.bf16.mxu0 0
      %1023 = vmatpush1.bf16.msra.mxu0 0
      %1024 = vmatprep.subr.bf16.mxu0 0
      %1025 = vmatpush1.bf16.msra.mxu0 0
      %1026 = vmatprep.subr.bf16.mxu0 0
      %1027 = vmatpush1.bf16.msra.mxu0 0
      %1028 = vmatprep.subr.bf16.mxu0 0
      %1029 = vmatpush1.bf16.msra.mxu0 0
      %1030 = vmatprep.mubr.bf16.mxu0 0
      %1031 = vmatmul.mubr.bf16.gmra.mrb[0].mxu0 %v948
      %v1032 = vpop.f32.mrb[0].mxu0
      %v1033 = vadd.f32 0.0, %v1032
      %v1034 = vpop.f32.mrb[0].mxu0
      %v1035 = vpop.f32.mrb[0].mxu0
      %v1036 = vpop.f32.mrb[0].mxu0
      %1037 = vdwg.mxu0
      %v1038 = vadd.f32 %v929, %v1033
      %1039 = vrot.lane.b32.xlu0 %v282, 96
      %v1040 = vpop.permute.xlu0 %1039
      %v1042 = vsel %vm289, %v1040, 0
      %1044 = vmatprep.subr.bf16.mxu0 0
      %1045 = vmatpush1.bf16.msra.mxu0 %v287
      %1046 = vmatprep.subr.bf16.mxu0 0
      %1047 = vmatpush1.bf16.msra.mxu0 0
      %1048 = vmatprep.subr.bf16.mxu0 0
      %1049 = vmatpush1.bf16.msra.mxu0 0
      %1050 = vmatprep.subr.bf16.mxu0 0
      %1051 = vmatpush1.bf16.msra.mxu0 0
      %1052 = vmatprep.subr.bf16.mxu0 0
      %1053 = vmatpush1.bf16.msra.mxu0 0
      %1054 = vmatprep.subr.bf16.mxu0 0
      %1055 = vmatpush1.bf16.msra.mxu0 0
      %1056 = vmatprep.subr.bf16.mxu0 0
      %1057 = vmatpush1.bf16.msra.mxu0 0
      %1058 = vmatprep.subr.bf16.mxu0 0
      %1059 = vmatpush1.bf16.msra.mxu0 0
      %1060 = vmatprep.subr.bf16.mxu0 0
      %1061 = vmatpush1.bf16.msra.mxu0 0
      %1062 = vmatprep.subr.bf16.mxu0 0
      %1063 = vmatpush1.bf16.msra.mxu0 0
      %1064 = vmatprep.subr.bf16.mxu0 0
      %1065 = vmatpush1.bf16.msra.mxu0 0
      %1066 = vmatprep.subr.bf16.mxu0 0
      %1067 = vmatpush1.bf16.msra.mxu0 0
      %1068 = vmatprep.subr.bf16.mxu0 0
      %1069 = vmatpush1.bf16.msra.mxu0 0
      %1070 = vmatprep.subr.bf16.mxu0 0
      %1071 = vmatpush1.bf16.msra.mxu0 0
      %1072 = vmatprep.subr.bf16.mxu0 0
      %1073 = vmatpush1.bf16.msra.mxu0 0
      %1074 = vmatprep.subr.bf16.mxu0 0
      %1075 = vmatpush1.bf16.msra.mxu0 0
      %1076 = vmatprep.mubr.bf16.mxu0 0
      %1077 = vmatmul.mubr.bf16.gmra.mrb[0].mxu0 %v1042
      %v1078 = vpop.f32.mrb[0].mxu0
      %v1079 = vadd.f32 %v276, %v1078
      %v1080 = vpop.f32.mrb[0].mxu0
      %v1081 = vpop.f32.mrb[0].mxu0
      %v1082 = vadd.f32 %v276, %v1081
      %v1083 = vpop.f32.mrb[0].mxu0
      %1084 = vdwg.mxu0
      %v1085 = vmax.f32 %v1079, 0.0
      %v1086 = vmax.f32 %v1082, 0.0
      %v1087 = vpack.c.bf16 %v1086, %v1085
      %s1088 = scalar_lea.vmem %s3, 192
      %v1089 = vld [vmem:[%s1088] sm:$0xf]
      %v1090 = vld [vmem:[%s1088 + $0x4] sm:$0xf]
      %v1091 = vld [vmem:[%s1088 + $0x8] sm:$0xf]
      %v1092 = vld [vmem:[%s1088 + $0xc] sm:$0xf]
      %v1093 = vld [vmem:[%s1088 + $0x10] sm:$0xf]
      %v1094 = vld [vmem:[%s1088 + $0x14] sm:$0xf]
      %v1095 = vld [vmem:[%s1088 + $0x18] sm:$0xf]
      %v1096 = vld [vmem:[%s1088 + $0x1c] sm:$0xf]
      %v1097 = vld [vmem:[%s1088 + $0x20] sm:$0xf]
      %v1098 = vld [vmem:[%s1088 + $0x24] sm:$0xf]
      %v1099 = vld [vmem:[%s1088 + $0x28] sm:$0xf]
      %v1100 = vld [vmem:[%s1088 + $0x2c] sm:$0xf]
      %v1101 = vld [vmem:[%s1088 + $0x30] sm:$0xf]
      %v1102 = vld [vmem:[%s1088 + $0x34] sm:$0xf]
      %v1103 = vld [vmem:[%s1088 + $0x38] sm:$0xf]
      %v1104 = vld [vmem:[%s1088 + $0x3c] sm:$0xf]
      %v1121 = vunpack.c.l.b16 %v1089
      %v1122 = vunpack.c.l.b16 %v1090
      %v1123 = vunpack.c.l.b16 %v1091
      %v1124 = vunpack.c.l.b16 %v1092
      %v1125 = vunpack.c.l.b16 %v1093
      %v1126 = vunpack.c.l.b16 %v1094
      %v1127 = vunpack.c.l.b16 %v1095
      %v1128 = vunpack.c.l.b16 %v1096
      %v1129 = vunpack.c.l.b16 %v1097
      %v1130 = vunpack.c.l.b16 %v1098
      %v1131 = vunpack.c.l.b16 %v1099
      %v1132 = vunpack.c.l.b16 %v1100
      %v1133 = vunpack.c.l.b16 %v1101
      %v1134 = vunpack.c.l.b16 %v1102
      %v1135 = vunpack.c.l.b16 %v1103
      %v1136 = vunpack.c.l.b16 %v1104
      %v1137 = vpack.c.b16 %v1122, %v1121
      %v1138 = vpack.c.b16 %v1124, %v1123
      %v1139 = vpack.c.b16 %v1126, %v1125
      %v1140 = vpack.c.b16 %v1128, %v1127
      %v1141 = vpack.c.b16 %v1130, %v1129
      %v1142 = vpack.c.b16 %v1132, %v1131
      %v1143 = vpack.c.b16 %v1134, %v1133
      %v1144 = vpack.c.b16 %v1136, %v1135
      %1153 = vmatprep.subr.bf16.mxu0 0
      %1154 = vmatpush1.bf16.msra.mxu0 %v1137
      %1155 = vmatprep.subr.bf16.mxu0 0
      %1156 = vmatpush1.bf16.msra.mxu0 %v1138
      %1157 = vmatprep.subr.bf16.mxu0 0
      %1158 = vmatpush1.bf16.msra.mxu0 %v1139
      %1159 = vmatprep.subr.bf16.mxu0 0
      %1160 = vmatpush1.bf16.msra.mxu0 %v1140
      %1161 = vmatprep.subr.bf16.mxu0 0
      %1162 = vmatpush1.bf16.msra.mxu0 %v1141
      %1163 = vmatprep.subr.bf16.mxu0 0
      %1164 = vmatpush1.bf16.msra.mxu0 %v1142
      %1165 = vmatprep.subr.bf16.mxu0 0
      %1166 = vmatpush1.bf16.msra.mxu0 %v1143
      %1167 = vmatprep.subr.bf16.mxu0 0
      %1168 = vmatpush1.bf16.msra.mxu0 %v1144
      %1169 = vmatprep.subr.bf16.mxu0 0
      %1170 = vmatpush1.bf16.msra.mxu0 0
      %1171 = vmatprep.subr.bf16.mxu0 0
      %1172 = vmatpush1.bf16.msra.mxu0 0
      %1173 = vmatprep.subr.bf16.mxu0 0
      %1174 = vmatpush1.bf16.msra.mxu0 0
      %1175 = vmatprep.subr.bf16.mxu0 0
      %1176 = vmatpush1.bf16.msra.mxu0 0
      %1177 = vmatprep.subr.bf16.mxu0 0
      %1178 = vmatpush1.bf16.msra.mxu0 0
      %1179 = vmatprep.subr.bf16.mxu0 0
      %1180 = vmatpush1.bf16.msra.mxu0 0
      %1181 = vmatprep.subr.bf16.mxu0 0
      %1182 = vmatpush1.bf16.msra.mxu0 0
      %1183 = vmatprep.subr.bf16.mxu0 0
      %1184 = vmatpush1.bf16.msra.mxu0 0
      %1185 = vmatprep.mubr.bf16.mxu0 0
      %1186 = vmatmul.mubr.bf16.gmra.mrb[0].mxu0 %v1087
      %v1187 = vpop.f32.mrb[0].mxu0
      %v1188 = vadd.f32 0.0, %v1187
      %v1189 = vpop.f32.mrb[0].mxu0
      %v1190 = vpop.f32.mrb[0].mxu0
      %v1191 = vpop.f32.mrb[0].mxu0
      %1192 = vdwg.mxu0
      %v1193 = vadd.f32 %v1038, %v1188
      %s1194 = scalar_lea.vmem %s3, 320
      %v1195 = vld [vmem:[%s1194] sm:$0xf]
      %v1196 = vld [vmem:[%s1194 + $0x4] sm:$0xf]
      %v1197 = vld [vmem:[%s1194 + $0x8] sm:$0xf]
      %v1198 = vld [vmem:[%s1194 + $0xc] sm:$0xf]
      %v1199 = vld [vmem:[%s1194 + $0x10] sm:$0xf]
      %v1200 = vld [vmem:[%s1194 + $0x14] sm:$0xf]
      %v1201 = vld [vmem:[%s1194 + $0x18] sm:$0xf]
      %v1202 = vld [vmem:[%s1194 + $0x1c] sm:$0xf]
      %v1203 = vld [vmem:[%s1194 + $0x20] sm:$0xf]
      %v1204 = vld [vmem:[%s1194 + $0x24] sm:$0xf]
      %v1205 = vld [vmem:[%s1194 + $0x28] sm:$0xf]
      %v1206 = vld [vmem:[%s1194 + $0x2c] sm:$0xf]
      %v1207 = vld [vmem:[%s1194 + $0x30] sm:$0xf]
      %v1208 = vld [vmem:[%s1194 + $0x34] sm:$0xf]
      %v1209 = vld [vmem:[%s1194 + $0x38] sm:$0xf]
      %v1210 = vld [vmem:[%s1194 + $0x3c] sm:$0xf]
      %v1212 = vshrl.u32 %v1087, 16
      %v1214 = vshll.u32 %v1087, 16
      %v1216 = vrot.slane %v1214, 1
      %v1217 = vor.u32 %v1212, %v1216
      %v1235 = vunpack.c.l.b16 %v1195
      %v1236 = vunpack.c.l.b16 %v1196
      %v1237 = vunpack.c.l.b16 %v1197
      %v1238 = vunpack.c.l.b16 %v1198
      %v1239 = vunpack.c.l.b16 %v1199
      %v1240 = vunpack.c.l.b16 %v1200
      %v1241 = vunpack.c.l.b16 %v1201
      %v1242 = vunpack.c.l.b16 %v1202
      %v1243 = vunpack.c.l.b16 %v1203
      %v1244 = vunpack.c.l.b16 %v1204
      %v1245 = vunpack.c.l.b16 %v1205
      %v1246 = vunpack.c.l.b16 %v1206
      %v1247 = vunpack.c.l.b16 %v1207
      %v1248 = vunpack.c.l.b16 %v1208
      %v1249 = vunpack.c.l.b16 %v1209
      %v1250 = vunpack.c.l.b16 %v1210
      %v1251 = vpack.c.b16 %v1236, %v1235
      %v1252 = vpack.c.b16 %v1238, %v1237
      %v1253 = vpack.c.b16 %v1240, %v1239
      %v1254 = vpack.c.b16 %v1242, %v1241
      %v1255 = vpack.c.b16 %v1244, %v1243
      %v1256 = vpack.c.b16 %v1246, %v1245
      %v1257 = vpack.c.b16 %v1248, %v1247
      %v1258 = vpack.c.b16 %v1250, %v1249
      %1267 = vmatprep.subr.bf16.mxu0 0
      %1268 = vmatpush1.bf16.msra.mxu0 %v1251
      %1269 = vmatprep.subr.bf16.mxu0 0
      %1270 = vmatpush1.bf16.msra.mxu0 %v1252
      %1271 = vmatprep.subr.bf16.mxu0 0
      %1272 = vmatpush1.bf16.msra.mxu0 %v1253
      %1273 = vmatprep.subr.bf16.mxu0 0
      %1274 = vmatpush1.bf16.msra.mxu0 %v1254
      %1275 = vmatprep.subr.bf16.mxu0 0
      %1276 = vmatpush1.bf16.msra.mxu0 %v1255
      %1277 = vmatprep.subr.bf16.mxu0 0
      %1278 = vmatpush1.bf16.msra.mxu0 %v1256
      %1279 = vmatprep.subr.bf16.mxu0 0
      %1280 = vmatpush1.bf16.msra.mxu0 %v1257
      %1281 = vmatprep.subr.bf16.mxu0 0
      %1282 = vmatpush1.bf16.msra.mxu0 %v1258
      %1283 = vmatprep.subr.bf16.mxu0 0
      %1284 = vmatpush1.bf16.msra.mxu0 0
      %1285 = vmatprep.subr.bf16.mxu0 0
      %1286 = vmatpush1.bf16.msra.mxu0 0
      %1287 = vmatprep.subr.bf16.mxu0 0
      %1288 = vmatpush1.bf16.msra.mxu0 0
      %1289 = vmatprep.subr.bf16.mxu0 0
      %1290 = vmatpush1.bf16.msra.mxu0 0
      %1291 = vmatprep.subr.bf16.mxu0 0
      %1292 = vmatpush1.bf16.msra.mxu0 0
      %1293 = vmatprep.subr.bf16.mxu0 0
      %1294 = vmatpush1.bf16.msra.mxu0 0
      %1295 = vmatprep.subr.bf16.mxu0 0
      %1296 = vmatpush1.bf16.msra.mxu0 0
      %1297 = vmatprep.subr.bf16.mxu0 0
      %1298 = vmatpush1.bf16.msra.mxu0 0
      %1299 = vmatprep.mubr.bf16.mxu0 0
      %1300 = vmatmul.mubr.bf16.gmra.mrb[0].mxu0 %v1217
      %v1301 = vpop.f32.mrb[0].mxu0
      %v1302 = vadd.f32 0.0, %v1301
      %v1303 = vpop.f32.mrb[0].mxu0
      %v1304 = vpop.f32.mrb[0].mxu0
      %v1305 = vpop.f32.mrb[0].mxu0
      %1306 = vdwg.mxu0
      %v1307 = vadd.f32 %v1193, %v1302
      %1308 = vrot.lane.b32.xlu0 %v282, 80
      %v1309 = vpop.permute.xlu0 %1308
      %v1311 = vsel %vm289, %v1309, 0
      %1313 = vmatprep.subr.bf16.mxu0 0
      %1314 = vmatpush1.bf16.msra.mxu0 %v287
      %1315 = vmatprep.subr.bf16.mxu0 0
      %1316 = vmatpush1.bf16.msra.mxu0 0
      %1317 = vmatprep.subr.bf16.mxu0 0
      %1318 = vmatpush1.bf16.msra.mxu0 0
      %1319 = vmatprep.subr.bf16.mxu0 0
      %1320 = vmatpush1.bf16.msra.mxu0 0
      %1321 = vmatprep.subr.bf16.mxu0 0
      %1322 = vmatpush1.bf16.msra.mxu0 0
      %1323 = vmatprep.subr.bf16.mxu0 0
      %1324 = vmatpush1.bf16.msra.mxu0 0
      %1325 = vmatprep.subr.bf16.mxu0 0
      %1326 = vmatpush1.bf16.msra.mxu0 0
      %1327 = vmatprep.subr.bf16.mxu0 0
      %1328 = vmatpush1.bf16.msra.mxu0 0
      %1329 = vmatprep.subr.bf16.mxu0 0
      %1330 = vmatpush1.bf16.msra.mxu0 0
      %1331 = vmatprep.subr.bf16.mxu0 0
      %1332 = vmatpush1.bf16.msra.mxu0 0
      %1333 = vmatprep.subr.bf16.mxu0 0
      %1334 = vmatpush1.bf16.msra.mxu0 0
      %1335 = vmatprep.subr.bf16.mxu0 0
      %1336 = vmatpush1.bf16.msra.mxu0 0
      %1337 = vmatprep.subr.bf16.mxu0 0
      %1338 = vmatpush1.bf16.msra.mxu0 0
      %1339 = vmatprep.subr.bf16.mxu0 0
      %1340 = vmatpush1.bf16.msra.mxu0 0
      %1341 = vmatprep.subr.bf16.mxu0 0
      %1342 = vmatpush1.bf16.msra.mxu0 0
      %1343 = vmatprep.subr.bf16.mxu0 0
      %1344 = vmatpush1.bf16.msra.mxu0 0
      %1345 = vmatprep.mubr.bf16.mxu0 0
      %1346 = vmatmul.mubr.bf16.gmra.mrb[0].mxu0 %v1311
      %v1347 = vpop.f32.mrb[0].mxu0
      %v1348 = vadd.f32 %v276, %v1347
      %v1349 = vpop.f32.mrb[0].mxu0
      %v1350 = vpop.f32.mrb[0].mxu0
      %v1351 = vadd.f32 %v276, %v1350
      %v1352 = vpop.f32.mrb[0].mxu0
      %1353 = vdwg.mxu0
      %v1354 = vmax.f32 %v1348, 0.0
      %v1355 = vmax.f32 %v1351, 0.0
      %v1356 = vpack.c.bf16 %v1355, %v1354
      %s1357 = scalar_lea.vmem %s3, 256
      %v1358 = vld [vmem:[%s1357] sm:$0xf]
      %v1359 = vld [vmem:[%s1357 + $0x4] sm:$0xf]
      %v1360 = vld [vmem:[%s1357 + $0x8] sm:$0xf]
      %v1361 = vld [vmem:[%s1357 + $0xc] sm:$0xf]
      %v1362 = vld [vmem:[%s1357 + $0x10] sm:$0xf]
      %v1363 = vld [vmem:[%s1357 + $0x14] sm:$0xf]
      %v1364 = vld [vmem:[%s1357 + $0x18] sm:$0xf]
      %v1365 = vld [vmem:[%s1357 + $0x1c] sm:$0xf]
      %v1366 = vld [vmem:[%s1357 + $0x20] sm:$0xf]
      %v1367 = vld [vmem:[%s1357 + $0x24] sm:$0xf]
      %v1368 = vld [vmem:[%s1357 + $0x28] sm:$0xf]
      %v1369 = vld [vmem:[%s1357 + $0x2c] sm:$0xf]
      %v1370 = vld [vmem:[%s1357 + $0x30] sm:$0xf]
      %v1371 = vld [vmem:[%s1357 + $0x34] sm:$0xf]
      %v1372 = vld [vmem:[%s1357 + $0x38] sm:$0xf]
      %v1373 = vld [vmem:[%s1357 + $0x3c] sm:$0xf]
      %v1390 = vunpack.c.l.b16 %v1358
      %v1391 = vunpack.c.l.b16 %v1359
      %v1392 = vunpack.c.l.b16 %v1360
      %v1393 = vunpack.c.l.b16 %v1361
      %v1394 = vunpack.c.l.b16 %v1362
      %v1395 = vunpack.c.l.b16 %v1363
      %v1396 = vunpack.c.l.b16 %v1364
      %v1397 = vunpack.c.l.b16 %v1365
      %v1398 = vunpack.c.l.b16 %v1366
      %v1399 = vunpack.c.l.b16 %v1367
      %v1400 = vunpack.c.l.b16 %v1368
      %v1401 = vunpack.c.l.b16 %v1369
      %v1402 = vunpack.c.l.b16 %v1370
      %v1403 = vunpack.c.l.b16 %v1371
      %v1404 = vunpack.c.l.b16 %v1372
      %v1405 = vunpack.c.l.b16 %v1373
      %v1406 = vpack.c.b16 %v1391, %v1390
      %v1407 = vpack.c.b16 %v1393, %v1392
      %v1408 = vpack.c.b16 %v1395, %v1394
      %v1409 = vpack.c.b16 %v1397, %v1396
      %v1410 = vpack.c.b16 %v1399, %v1398
      %v1411 = vpack.c.b16 %v1401, %v1400
      %v1412 = vpack.c.b16 %v1403, %v1402
      %v1413 = vpack.c.b16 %v1405, %v1404
      %1422 = vmatprep.subr.bf16.mxu0 0
      %1423 = vmatpush1.bf16.msra.mxu0 %v1406
      %1424 = vmatprep.subr.bf16.mxu0 0
      %1425 = vmatpush1.bf16.msra.mxu0 %v1407
      %1426 = vmatprep.subr.bf16.mxu0 0
      %1427 = vmatpush1.bf16.msra.mxu0 %v1408
      %1428 = vmatprep.subr.bf16.mxu0 0
      %1429 = vmatpush1.bf16.msra.mxu0 %v1409
      %1430 = vmatprep.subr.bf16.mxu0 0
      %1431 = vmatpush1.bf16.msra.mxu0 %v1410
      %1432 = vmatprep.subr.bf16.mxu0 0
      %1433 = vmatpush1.bf16.msra.mxu0 %v1411
      %1434 = vmatprep.subr.bf16.mxu0 0
      %1435 = vmatpush1.bf16.msra.mxu0 %v1412
      %1436 = vmatprep.subr.bf16.mxu0 0
      %1437 = vmatpush1.bf16.msra.mxu0 %v1413
      %1438 = vmatprep.subr.bf16.mxu0 0
      %1439 = vmatpush1.bf16.msra.mxu0 0
      %1440 = vmatprep.subr.bf16.mxu0 0
      %1441 = vmatpush1.bf16.msra.mxu0 0
      %1442 = vmatprep.subr.bf16.mxu0 0
      %1443 = vmatpush1.bf16.msra.mxu0 0
      %1444 = vmatprep.subr.bf16.mxu0 0
      %1445 = vmatpush1.bf16.msra.mxu0 0
      %1446 = vmatprep.subr.bf16.mxu0 0
      %1447 = vmatpush1.bf16.msra.mxu0 0
      %1448 = vmatprep.subr.bf16.mxu0 0
      %1449 = vmatpush1.bf16.msra.mxu0 0
      %1450 = vmatprep.subr.bf16.mxu0 0
      %1451 = vmatpush1.bf16.msra.mxu0 0
      %1452 = vmatprep.subr.bf16.mxu0 0
      %1453 = vmatpush1.bf16.msra.mxu0 0
      %1454 = vmatprep.mubr.bf16.mxu0 0
      %1455 = vmatmul.mubr.bf16.gmra.mrb[0].mxu0 %v1356
      %v1456 = vpop.f32.mrb[0].mxu0
      %v1457 = vadd.f32 0.0, %v1456
      %v1458 = vpop.f32.mrb[0].mxu0
      %v1459 = vpop.f32.mrb[0].mxu0
      %v1460 = vpop.f32.mrb[0].mxu0
      %1461 = vdwg.mxu0
      %v1462 = vadd.f32 %v1307, %v1457
      %v1463 = vmax.f32 %v1462, 0.0
      %1464 = vst [vmem:[%s258] sm:$0xff] %v1463
      %p1465 = scmp.lt.s32.totalorder %s20, 1
      %s1466 = scalar_select %p1465, %s20, 1
      %p1467 = scmp.lt.s32.totalorder %s21, 1
      %s1468 = scalar_select %p1467, %s21, 1
      %s1469 = smul.addr %s1466, 2
      %s1470 = sadd.s32 %s1468, %s1469
      %s1471 = smul.addr %s1470, 8
      %s1472 = scalar_lea.vmem %s5, %s1471
      // Predicated region
      $region41: #{_forward.1} parent=39 // pred_check
        %p1473 = pneg %p160
      $region42: #{_forward.1} parent=39 // pred_check_branch
        %1475 = sbr.rel (%p1473) target = $region44
      $region43: #{_forward.1} parent=39 // pred_region
        _
      $region44: #{_forward.1} parent=39 // pred_fallthru
        _
    $region40: #{_forward.1} parent=5 // pred_fallthru
      _
    %p1476 = scmp.le.s32.totalorder 2, %s11
    // Predicated region
    $region45: #{_forward.1} parent=5 // pred_check
      %p1477 = pneg %p1476
    $region46: #{_forward.1} parent=5 // pred_check_branch
      %1479 = sbr.rel (%p1477) target = $region48
    $region47: #{_forward.1} parent=5 // pred_region
      %s1480 = ssub.s32 %s11, 2
      // Predicated region
      $region49: #{_forward.1} parent=47 // pred_check
        %p1481 = pneg %p166
      $region50: #{_forward.1} parent=47 // pred_check_branch
        %1483 = sbr.rel (%p1481) target = $region52
      $region51: #{_forward.1} parent=47 // pred_region
        %p1484 = scmp.lt.s32.totalorder %s22, 1
        %s1485 = scalar_select %p1484, %s22, 1
        %p1486 = scmp.lt.s32.totalorder %s23, 1
        %s1487 = scalar_select %p1486, %s23, 1
        %s1488 = smul.addr %s1485, 2
        %s1489 = sadd.s32 %s1487, %s1488
        %s1490 = smul.addr %s1489, 8
        %s1491 = scalar_lea.vmem %s5, %s1490
      $region52: #{_forward.1} parent=47 // pred_fallthru
        _
    $region48: #{_forward.1} parent=5 // pred_fallthru
      _
  $region6: #{_forward.1} parent=0 // loop_footer
    %s15 = sadd.s32 1, %s11
  $region7: #{_forward.1} parent=0 // loop_footer_branch
    %10 = sbr.rel target = $region3
  $region8: #{_forward.1} parent=0 // loop_exit
    _

</llo_original>
